<compile_context>
chip_gen: v7x
topology: tpu7x:2x2x1
jax: 0.10.0
libtpu: 0.0.40
codegen_flags: <defaults>
</compile_context>

<pallas_src>
import numpy as np
import jax
import jax.numpy as jnp
from jax.experimental import pallas as pl
from jax.experimental.pallas import tpu as pltpu


def make_quantizer_params(nq=25, minv=0.0, maxv=1.0):
    """Deterministic quantizer params, exactly mirroring APLoss.__init__ (f32)."""
    gap = maxv - minv
    a = (nq - 1) / gap
    w1 = np.full((nq,), -a, dtype=np.float32)
    b1 = (a * minv + np.arange(nq, 0, -1)).astype(np.float32)
    w2 = np.full((nq,), a, dtype=np.float32)
    b2 = (np.arange(2 - nq, 2, 1) - a * minv).astype(np.float32)
    # q.weight[0] = q.weight[-1] = 0 ; q.bias[0] = q.bias[-1] = 1
    w1[0] = 0.0
    b1[0] = 1.0
    w2[-1] = 0.0
    b2[-1] = 1.0
    return w1, b1, w2, b2


def _make_aploss_kernel(nq, a_f32, b1_vals, b2_vals, tile_m, chunk_group=8):
    """Builds the kernel with quantizer params baked in as compile-time scalars."""
    lane = 128
    n_chunks = tile_m // lane

    def kernel(x_ref, lab_ref, ap_ref, nbs_acc, rec_acc):
        mi = pl.program_id(1)

        @pl.when(mi == 0)
        def _init():
            nbs_acc[...] = jnp.zeros_like(nbs_acc)
            rec_acc[...] = jnp.zeros_like(rec_acc)

        # --- Hot loop: quantize + lane-resident accumulate (VALU only). -------
        c0 = 0
        while c0 < n_chunks:                      # static trace-time loop
            g = min(chunk_group, n_chunks - c0)
            u_g, lab_g = [], []
            for i in range(g):                    # load chunk group once, hoist u = a*x
                lo = (c0 + i) * lane
                u_g.append(a_f32 * x_ref[:, lo:lo + lane])      # (tile_n, 128)
                lab_g.append(lab_ref[:, lo:lo + lane])          # (tile_n, 128)
            for k in range(nq):                   # bins unrolled: constants are literals
                accn = None
                accr = None
                for i in range(g):
                    u = u_g[i]
                    if k == 0:                    # w1[0]=0, b1[0]=1
                        m = jnp.minimum(1.0, b2_vals[k] + u)
                    elif k == nq - 1:             # w2[-1]=0, b2[-1]=1
                        m = jnp.minimum(b1_vals[k] - u, 1.0)
                    else:                         # interior bins: +/-a structure
                        m = jnp.minimum(b1_vals[k] - u, b2_vals[k] + u)
                    q = jnp.maximum(m, 0.0)       # (tile_n, 128)
                    ql = q * lab_g[i]
                    accn = q if accn is None else accn + q
                    accr = ql if accr is None else accr + ql
                # One VMEM read-modify-write per bin per chunk group.
                nbs_acc[k] += accn
                rec_acc[k] += accr
            c0 += g

        # --- Epilogue (last M tile only): reduce lanes once, cumsum, AP. ------
        @pl.when(mi == pl.num_programs(1) - 1)
        def _finalize():
            nbs = jnp.transpose(jnp.sum(nbs_acc[...], axis=-1))   # (tile_n, nq)
            rec = jnp.transpose(jnp.sum(rec_acc[...], axis=-1))   # (tile_n, nq)
            # Cumulative sums along nq via upper-triangular-ones matmul (MXU):
            # cum[n, k] = sum_j rec[n, j] * [j <= k]
            row = jax.lax.broadcasted_iota(jnp.int32, (nq, nq), 0)
            col = jax.lax.broadcasted_iota(jnp.int32, (nq, nq), 1)
            mask = (row <= col).astype(jnp.float32)
            rec_cum = jnp.dot(rec, mask, preferred_element_type=jnp.float32)
            nbs_cum = jnp.dot(nbs, mask, preferred_element_type=jnp.float32)
            prec = rec_cum / (1e-16 + nbs_cum)
            rec_n = rec / (1e-16 + jnp.sum(rec, axis=-1, keepdims=True))
            ap_ref[...] = jnp.sum(prec * rec_n, axis=-1, keepdims=True)  # (tile_n, 1)

    return kernel


def ap_loss_pallas(x, label, nq=25, minv=0.0, maxv=1.0, tile_m=2048, tile_n=8):
    """Returns 1 - mAP, matching APLoss.forward(x, label) with ret='1-mAP'."""
    assert isinstance(nq, int) and 2 <= nq <= 100
    N, M = x.shape
    assert x.shape == label.shape
    tile_m = min(tile_m, M)
    tile_n = min(tile_n, N)
    assert M % tile_m == 0 and tile_m % 128 == 0, "M must tile into multiples of 128"
    assert N % tile_n == 0 and (tile_n == N or tile_n % 8 == 0), "N must tile by 8"

    # Bake quantizer params as compile-time scalars (exact f32 values).
    _, b1, _, b2 = make_quantizer_params(nq, minv, maxv)
    a_f32 = float(np.float32((nq - 1) / (maxv - minv)))
    b1_vals = [float(v) for v in b1]
    b2_vals = [float(v) for v in b2]

    kernel = _make_aploss_kernel(nq, a_f32, b1_vals, b2_vals, tile_m)

    grid = (N // tile_n, M // tile_m)
    ap = pl.pallas_call(
        kernel,
        out_shape=jax.ShapeDtypeStruct((N, 1), jnp.float32),
        grid_spec=pltpu.PrefetchScalarGridSpec(
            num_scalar_prefetch=0,
            grid=grid,
            in_specs=[
                pl.BlockSpec((tile_n, tile_m), lambda ni, mi: (ni, mi)),   # x
                pl.BlockSpec((tile_n, tile_m), lambda ni, mi: (ni, mi)),   # label
            ],
            out_specs=pl.BlockSpec((tile_n, 1), lambda ni, mi: (ni, 0)),
            scratch_shapes=[
                pltpu.VMEM((nq, tile_n, 128), jnp.float32),   # lane-resident nbs partials
                pltpu.VMEM((nq, tile_n, 128), jnp.float32),   # lane-resident rec partials
            ],
        ),
        compiler_params=pltpu.CompilerParams(
            dimension_semantics=("parallel", "arbitrary"),
            vmem_limit_bytes=32 * 1024 * 1024,
        ),
    )(x.astype(jnp.float32), label.astype(jnp.float32))

    return 1.0 - jnp.mean(ap[:, 0])


def ap_loss_ref(x, label, nq=25, minv=0.0, maxv=1.0):
    """Pure-JAX reference, mirroring the PyTorch module."""
    w1, b1, w2, b2 = make_quantizer_params(nq, minv, maxv)
    x = x.astype(jnp.float32)
    label = label.astype(jnp.float32)
    q1 = w1[None, :, None] * x[:, None, :] + b1[None, :, None]
    q2 = w2[None, :, None] * x[:, None, :] + b2[None, :, None]
    q = jnp.maximum(jnp.minimum(q1, q2), 0.0)          # (N, nq, M)
    nbs = q.sum(-1)
    rec = (q * label[:, None, :]).sum(-1)
    prec = jnp.cumsum(rec, -1) / (1e-16 + jnp.cumsum(nbs, -1))
    rec = rec / (1e-16 + rec.sum(-1, keepdims=True))
    ap = (prec * rec).sum(-1)
    return 1.0 - ap.mean()


if __name__ == "__main__":
    key = jax.random.PRNGKey(0)
    kx, kl = jax.random.split(key)

    N, M, NQ = 8, 256, 25
    # Scores in [0, 1] (the quantizer's [min, max] range), binary labels.
    x = jax.random.uniform(kx, (N, M), dtype=jnp.float32)
    label = (jax.random.uniform(kl, (N, M)) < 0.25).astype(jnp.float32)

    loss = ap_loss_pallas(x, label, nq=NQ, minv=0.0, maxv=1.0)
    loss = jax.block_until_ready(loss)

    loss_ref = ap_loss_ref(x, label, nq=NQ, minv=0.0, maxv=1.0)
    assert jnp.allclose(loss, loss_ref, atol=1e-5, rtol=1e-5), (loss, loss_ref)

    print("KERNEL_OK")
</pallas_src>

<mosaic_0001>
module attributes {stable_mosaic.version = 11 : i64} {
  func.func @kernel(%arg0: i32, %arg1: i32, %arg2: memref<8x256xf32, #tpu.memory_space<vmem>>, %arg3: memref<8x256xf32, #tpu.memory_space<vmem>>, %arg4: memref<8x1xf32, #tpu.memory_space<vmem>>, %arg5: memref<25x8x128xf32, #tpu.memory_space<vmem>>, %arg6: memref<25x8x128xf32, #tpu.memory_space<vmem>>) attributes {dimension_semantics = [#tpu.dimension_semantics<parallel>, #tpu.dimension_semantics<arbitrary>], iteration_bounds = array<i64: 1, 1>, scalar_prefetch = 0 : i64, scratch_operands = 2 : i64, tpu.core_type = #tpu.core_type<tc>, window_params = [{transform_indices = @transform_0, window_bounds = array<i64: 8, 256>}, {transform_indices = @transform_1, window_bounds = array<i64: 8, 256>}, {transform_indices = @transform_2, window_bounds = array<i64: 8, 1>}]} {
    %c0_i32 = arith.constant 0 : i32
    %0 = arith.cmpi eq, %arg1, %c0_i32 : i32
    %1 = arith.extui %0 : i1 to i32
    %c0_i32_0 = arith.constant 0 : i32
    %2 = arith.cmpi ne, %1, %c0_i32_0 : i32
    scf.if %2 {
      %cst_436 = arith.constant 0.000000e+00 : f32
      %760 = vector.broadcast %cst_436 : f32 to vector<25x8x128xf32>
      %c0_437 = arith.constant 0 : index
      %c0_438 = arith.constant 0 : index
      %c0_439 = arith.constant 0 : index
      %761 = vector.load %arg5[%c0_437, %c0_438, %c0_439] : memref<25x8x128xf32, #tpu.memory_space<vmem>>, vector<25x8x128xf32>
      tpu.vector_store %arg5[%c0_437, %c0_438, %c0_439], %760 {strides = array<i32>} : memref<25x8x128xf32, #tpu.memory_space<vmem>>, vector<25x8x128xf32>,
      %cst_440 = arith.constant 0.000000e+00 : f32
      %762 = vector.broadcast %cst_440 : f32 to vector<25x8x128xf32>
      %c0_441 = arith.constant 0 : index
      %c0_442 = arith.constant 0 : index
      %c0_443 = arith.constant 0 : index
      %763 = vector.load %arg6[%c0_441, %c0_442, %c0_443] : memref<25x8x128xf32, #tpu.memory_space<vmem>>, vector<25x8x128xf32>
      tpu.vector_store %arg6[%c0_441, %c0_442, %c0_443], %762 {strides = array<i32>} : memref<25x8x128xf32, #tpu.memory_space<vmem>>, vector<25x8x128xf32>,
    } else {
    }
    %c0 = arith.constant 0 : index
    %c0_1 = arith.constant 0 : index
    %3 = vector.load %arg2[%c0, %c0_1] : memref<8x256xf32, #tpu.memory_space<vmem>>, vector<8x128xf32>
    %cst = arith.constant 2.400000e+01 : f32
    %4 = vector.broadcast %cst : f32 to vector<8x128xf32>
    %5 = arith.mulf %4, %3 : vector<8x128xf32>
    %c0_2 = arith.constant 0 : index
    %c0_3 = arith.constant 0 : index
    %6 = vector.load %arg3[%c0_2, %c0_3] : memref<8x256xf32, #tpu.memory_space<vmem>>, vector<8x128xf32>
    %c0_4 = arith.constant 0 : index
    %c128 = arith.constant 128 : index
    %7 = vector.load %arg2[%c0_4, %c128] : memref<8x256xf32, #tpu.memory_space<vmem>>, vector<8x128xf32>
    %cst_5 = arith.constant 2.400000e+01 : f32
    %8 = vector.broadcast %cst_5 : f32 to vector<8x128xf32>
    %9 = arith.mulf %8, %7 : vector<8x128xf32>
    %c0_6 = arith.constant 0 : index
    %c128_7 = arith.constant 128 : index
    %10 = vector.load %arg3[%c0_6, %c128_7] : memref<8x256xf32, #tpu.memory_space<vmem>>, vector<8x128xf32>
    %cst_8 = arith.constant -2.300000e+01 : f32
    %11 = vector.broadcast %cst_8 : f32 to vector<8x128xf32>
    %12 = arith.addf %11, %5 : vector<8x128xf32>
    %cst_9 = arith.constant 1.000000e+00 : f32
    %13 = vector.broadcast %cst_9 : f32 to vector<8x128xf32>
    %14 = arith.minimumf %13, %12 : vector<8x128xf32>
    %cst_10 = arith.constant 0.000000e+00 : f32
    %15 = vector.broadcast %cst_10 : f32 to vector<8x128xf32>
    %16 = arith.maximumf %14, %15 : vector<8x128xf32>
    %17 = arith.mulf %16, %6 : vector<8x128xf32>
    %cst_11 = arith.constant -2.300000e+01 : f32
    %18 = vector.broadcast %cst_11 : f32 to vector<8x128xf32>
    %19 = arith.addf %18, %9 : vector<8x128xf32>
    %cst_12 = arith.constant 1.000000e+00 : f32
    %20 = vector.broadcast %cst_12 : f32 to vector<8x128xf32>
    %21 = arith.minimumf %20, %19 : vector<8x128xf32>
    %cst_13 = arith.constant 0.000000e+00 : f32
    %22 = vector.broadcast %cst_13 : f32 to vector<8x128xf32>
    %23 = arith.maximumf %21, %22 : vector<8x128xf32>
    %24 = arith.mulf %23, %10 : vector<8x128xf32>
    %25 = arith.addf %16, %23 : vector<8x128xf32>
    %26 = arith.addf %17, %24 : vector<8x128xf32>
    %c0_14 = arith.constant 0 : index
    %c0_15 = arith.constant 0 : index
    %c0_16 = arith.constant 0 : index
    %27 = vector.load %arg5[%c0_14, %c0_15, %c0_16] : memref<25x8x128xf32, #tpu.memory_space<vmem>>, vector<1x8x128xf32>
    %28 = vector.shape_cast %27 : vector<1x8x128xf32> to vector<8x128xf32>
    %29 = arith.addf %28, %25 : vector<8x128xf32>
    %c0_17 = arith.constant 0 : index
    %c0_18 = arith.constant 0 : index
    %c0_19 = arith.constant 0 : index
    %30 = vector.load %arg5[%c0_17, %c0_18, %c0_19] : memref<25x8x128xf32, #tpu.memory_space<vmem>>, vector<1x8x128xf32>
    %31 = vector.shape_cast %30 : vector<1x8x128xf32> to vector<8x128xf32>
    %32 = vector.shape_cast %29 : vector<8x128xf32> to vector<1x8x128xf32>
    tpu.vector_store %arg5[%c0_17, %c0_18, %c0_19], %32 {strides = array<i32>} : memref<25x8x128xf32, #tpu.memory_space<vmem>>, vector<1x8x128xf32>,
    %c0_20 = arith.constant 0 : index
    %c0_21 = arith.constant 0 : index
    %c0_22 = arith.constant 0 : index
    %33 = vector.load %arg6[%c0_20, %c0_21, %c0_22] : memref<25x8x128xf32, #tpu.memory_space<vmem>>, vector<1x8x128xf32>
    %34 = vector.shape_cast %33 : vector<1x8x128xf32> to vector<8x128xf32>
    %35 = arith.addf %34, %26 : vector<8x128xf32>
    %c0_23 = arith.constant 0 : index
    %c0_24 = arith.constant 0 : index
    %c0_25 = arith.constant 0 : index
    %36 = vector.load %arg6[%c0_23, %c0_24, %c0_25] : memref<25x8x128xf32, #tpu.memory_space<vmem>>, vector<1x8x128xf32>
    %37 = vector.shape_cast %36 : vector<1x8x128xf32> to vector<8x128xf32>
    %38 = vector.shape_cast %35 : vector<8x128xf32> to vector<1x8x128xf32>
    tpu.vector_store %arg6[%c0_23, %c0_24, %c0_25], %38 {strides = array<i32>} : memref<25x8x128xf32, #tpu.memory_space<vmem>>, vector<1x8x128xf32>,
    %cst_26 = arith.constant 2.400000e+01 : f32
    %39 = vector.broadcast %cst_26 : f32 to vector<8x128xf32>
    %40 = arith.subf %39, %5 : vector<8x128xf32>
    %cst_27 = arith.constant -2.200000e+01 : f32
    %41 = vector.broadcast %cst_27 : f32 to vector<8x128xf32>
    %42 = arith.addf %41, %5 : vector<8x128xf32>
    %43 = arith.minimumf %40, %42 : vector<8x128xf32>
    %cst_28 = arith.constant 0.000000e+00 : f32
    %44 = vector.broadcast %cst_28 : f32 to vector<8x128xf32>
    %45 = arith.maximumf %43, %44 : vector<8x128xf32>
    %46 = arith.mulf %45, %6 : vector<8x128xf32>
    %cst_29 = arith.constant 2.400000e+01 : f32
    %47 = vector.broadcast %cst_29 : f32 to vector<8x128xf32>
    %48 = arith.subf %47, %9 : vector<8x128xf32>
    %cst_30 = arith.constant -2.200000e+01 : f32
    %49 = vector.broadcast %cst_30 : f32 to vector<8x128xf32>
    %50 = arith.addf %49, %9 : vector<8x128xf32>
    %51 = arith.minimumf %48, %50 : vector<8x128xf32>
    %cst_31 = arith.constant 0.000000e+00 : f32
    %52 = vector.broadcast %cst_31 : f32 to vector<8x128xf32>
    %53 = arith.maximumf %51, %52 : vector<8x128xf32>
    %54 = arith.mulf %53, %10 : vector<8x128xf32>
    %55 = arith.addf %45, %53 : vector<8x128xf32>
    %56 = arith.addf %46, %54 : vector<8x128xf32>
    %c1 = arith.constant 1 : index
    %c0_32 = arith.constant 0 : index
    %c0_33 = arith.constant 0 : index
    %57 = vector.load %arg5[%c1, %c0_32, %c0_33] : memref<25x8x128xf32, #tpu.memory_space<vmem>>, vector<1x8x128xf32>
    %58 = vector.shape_cast %57 : vector<1x8x128xf32> to vector<8x128xf32>
    %59 = arith.addf %58, %55 : vector<8x128xf32>
    %c1_34 = arith.constant 1 : index
    %c0_35 = arith.constant 0 : index
    %c0_36 = arith.constant 0 : index
    %60 = vector.load %arg5[%c1_34, %c0_35, %c0_36] : memref<25x8x128xf32, #tpu.memory_space<vmem>>, vector<1x8x128xf32>
    %61 = vector.shape_cast %60 : vector<1x8x128xf32> to vector<8x128xf32>
    %62 = vector.shape_cast %59 : vector<8x128xf32> to vector<1x8x128xf32>
    tpu.vector_store %arg5[%c1_34, %c0_35, %c0_36], %62 {strides = array<i32>} : memref<25x8x128xf32, #tpu.memory_space<vmem>>, vector<1x8x128xf32>,
    %c1_37 = arith.constant 1 : index
    %c0_38 = arith.constant 0 : index
    %c0_39 = arith.constant 0 : index
    %63 = vector.load %arg6[%c1_37, %c0_38, %c0_39] : memref<25x8x128xf32, #tpu.memory_space<vmem>>, vector<1x8x128xf32>
    %64 = vector.shape_cast %63 : vector<1x8x128xf32> to vector<8x128xf32>
    %65 = arith.addf %64, %56 : vector<8x128xf32>
    %c1_40 = arith.constant 1 : index
    %c0_41 = arith.constant 0 : index
    %c0_42 = arith.constant 0 : index
    %66 = vector.load %arg6[%c1_40, %c0_41, %c0_42] : memref<25x8x128xf32, #tpu.memory_space<vmem>>, vector<1x8x128xf32>
    %67 = vector.shape_cast %66 : vector<1x8x128xf32> to vector<8x128xf32>
    %68 = vector.shape_cast %65 : vector<8x128xf32> to vector<1x8x128xf32>
    tpu.vector_store %arg6[%c1_40, %c0_41, %c0_42], %68 {strides = array<i32>} : memref<25x8x128xf32, #tpu.memory_space<vmem>>, vector<1x8x128xf32>,
    %cst_43 = arith.constant 2.300000e+01 : f32
    %69 = vector.broadcast %cst_43 : f32 to vector<8x128xf32>
    %70 = arith.subf %69, %5 : vector<8x128xf32>
    %cst_44 = arith.constant -2.100000e+01 : f32
    %71 = vector.broadcast %cst_44 : f32 to vector<8x128xf32>
    %72 = arith.addf %71, %5 : vector<8x128xf32>
    %73 = arith.minimumf %70, %72 : vector<8x128xf32>
    %cst_45 = arith.constant 0.000000e+00 : f32
    %74 = vector.broadcast %cst_45 : f32 to vector<8x128xf32>
    %75 = arith.maximumf %73, %74 : vector<8x128xf32>
    %76 = arith.mulf %75, %6 : vector<8x128xf32>
    %cst_46 = arith.constant 2.300000e+01 : f32
    %77 = vector.broadcast %cst_46 : f32 to vector<8x128xf32>
    %78 = arith.subf %77, %9 : vector<8x128xf32>
    %cst_47 = arith.constant -2.100000e+01 : f32
    %79 = vector.broadcast %cst_47 : f32 to vector<8x128xf32>
    %80 = arith.addf %79, %9 : vector<8x128xf32>
    %81 = arith.minimumf %78, %80 : vector<8x128xf32>
    %cst_48 = arith.constant 0.000000e+00 : f32
    %82 = vector.broadcast %cst_48 : f32 to vector<8x128xf32>
    %83 = arith.maximumf %81, %82 : vector<8x128xf32>
    %84 = arith.mulf %83, %10 : vector<8x128xf32>
    %85 = arith.addf %75, %83 : vector<8x128xf32>
    %86 = arith.addf %76, %84 : vector<8x128xf32>
    %c2 = arith.constant 2 : index
    %c0_49 = arith.constant 0 : index
    %c0_50 = arith.constant 0 : index
    %87 = vector.load %arg5[%c2, %c0_49, %c0_50] : memref<25x8x128xf32, #tpu.memory_space<vmem>>, vector<1x8x128xf32>
    %88 = vector.shape_cast %87 : vector<1x8x128xf32> to vector<8x128xf32>
    %89 = arith.addf %88, %85 : vector<8x128xf32>
    %c2_51 = arith.constant 2 : index
    %c0_52 = arith.constant 0 : index
    %c0_53 = arith.constant 0 : index
    %90 = vector.load %arg5[%c2_51, %c0_52, %c0_53] : memref<25x8x128xf32, #tpu.memory_space<vmem>>, vector<1x8x128xf32>
    %91 = vector.shape_cast %90 : vector<1x8x128xf32> to vector<8x128xf32>
    %92 = vector.shape_cast %89 : vector<8x128xf32> to vector<1x8x128xf32>
    tpu.vector_store %arg5[%c2_51, %c0_52, %c0_53], %92 {strides = array<i32>} : memref<25x8x128xf32, #tpu.memory_space<vmem>>, vector<1x8x128xf32>,
    %c2_54 = arith.constant 2 : index
    %c0_55 = arith.constant 0 : index
    %c0_56 = arith.constant 0 : index
    %93 = vector.load %arg6[%c2_54, %c0_55, %c0_56] : memref<25x8x128xf32, #tpu.memory_space<vmem>>, vector<1x8x128xf32>
    %94 = vector.shape_cast %93 : vector<1x8x128xf32> to vector<8x128xf32>
    %95 = arith.addf %94, %86 : vector<8x128xf32>
    %c2_57 = arith.constant 2 : index
    %c0_58 = arith.constant 0 : index
    %c0_59 = arith.constant 0 : index
    %96 = vector.load %arg6[%c2_57, %c0_58, %c0_59] : memref<25x8x128xf32, #tpu.memory_space<vmem>>, vector<1x8x128xf32>
    %97 = vector.shape_cast %96 : vector<1x8x128xf32> to vector<8x128xf32>
    %98 = vector.shape_cast %95 : vector<8x128xf32> to vector<1x8x128xf32>
    tpu.vector_store %arg6[%c2_57, %c0_58, %c0_59], %98 {strides = array<i32>} : memref<25x8x128xf32, #tpu.memory_space<vmem>>, vector<1x8x128xf32>,
    %cst_60 = arith.constant 2.200000e+01 : f32
    %99 = vector.broadcast %cst_60 : f32 to vector<8x128xf32>
    %100 = arith.subf %99, %5 : vector<8x128xf32>
    %cst_61 = arith.constant -2.000000e+01 : f32
    %101 = vector.broadcast %cst_61 : f32 to vector<8x128xf32>
    %102 = arith.addf %101, %5 : vector<8x128xf32>
    %103 = arith.minimumf %100, %102 : vector<8x128xf32>
    %cst_62 = arith.constant 0.000000e+00 : f32
    %104 = vector.broadcast %cst_62 : f32 to vector<8x128xf32>
    %105 = arith.maximumf %103, %104 : vector<8x128xf32>
    %106 = arith.mulf %105, %6 : vector<8x128xf32>
    %cst_63 = arith.constant 2.200000e+01 : f32
    %107 = vector.broadcast %cst_63 : f32 to vector<8x128xf32>
    %108 = arith.subf %107, %9 : vector<8x128xf32>
    %cst_64 = arith.constant -2.000000e+01 : f32
    %109 = vector.broadcast %cst_64 : f32 to vector<8x128xf32>
    %110 = arith.addf %109, %9 : vector<8x128xf32>
    %111 = arith.minimumf %108, %110 : vector<8x128xf32>
    %cst_65 = arith.constant 0.000000e+00 : f32
    %112 = vector.broadcast %cst_65 : f32 to vector<8x128xf32>
    %113 = arith.maximumf %111, %112 : vector<8x128xf32>
    %114 = arith.mulf %113, %10 : vector<8x128xf32>
    %115 = arith.addf %105, %113 : vector<8x128xf32>
    %116 = arith.addf %106, %114 : vector<8x128xf32>
    %c3 = arith.constant 3 : index
    %c0_66 = arith.constant 0 : index
    %c0_67 = arith.constant 0 : index
    %117 = vector.load %arg5[%c3, %c0_66, %c0_67] : memref<25x8x128xf32, #tpu.memory_space<vmem>>, vector<1x8x128xf32>
    %118 = vector.shape_cast %117 : vector<1x8x128xf32> to vector<8x128xf32>
    %119 = arith.addf %118, %115 : vector<8x128xf32>
    %c3_68 = arith.constant 3 : index
    %c0_69 = arith.constant 0 : index
    %c0_70 = arith.constant 0 : index
    %120 = vector.load %arg5[%c3_68, %c0_69, %c0_70] : memref<25x8x128xf32, #tpu.memory_space<vmem>>, vector<1x8x128xf32>
    %121 = vector.shape_cast %120 : vector<1x8x128xf32> to vector<8x128xf32>
    %122 = vector.shape_cast %119 : vector<8x128xf32> to vector<1x8x128xf32>
    tpu.vector_store %arg5[%c3_68, %c0_69, %c0_70], %122 {strides = array<i32>} : memref<25x8x128xf32, #tpu.memory_space<vmem>>, vector<1x8x128xf32>,
    %c3_71 = arith.constant 3 : index
    %c0_72 = arith.constant 0 : index
    %c0_73 = arith.constant 0 : index
    %123 = vector.load %arg6[%c3_71, %c0_72, %c0_73] : memref<25x8x128xf32, #tpu.memory_space<vmem>>, vector<1x8x128xf32>
    %124 = vector.shape_cast %123 : vector<1x8x128xf32> to vector<8x128xf32>
    %125 = arith.addf %124, %116 : vector<8x128xf32>
    %c3_74 = arith.constant 3 : index
    %c0_75 = arith.constant 0 : index
    %c0_76 = arith.constant 0 : index
    %126 = vector.load %arg6[%c3_74, %c0_75, %c0_76] : memref<25x8x128xf32, #tpu.memory_space<vmem>>, vector<1x8x128xf32>
    %127 = vector.shape_cast %126 : vector<1x8x128xf32> to vector<8x128xf32>
    %128 = vector.shape_cast %125 : vector<8x128xf32> to vector<1x8x128xf32>
    tpu.vector_store %arg6[%c3_74, %c0_75, %c0_76], %128 {strides = array<i32>} : memref<25x8x128xf32, #tpu.memory_space<vmem>>, vector<1x8x128xf32>,
    %cst_77 = arith.constant 2.100000e+01 : f32
    %129 = vector.broadcast %cst_77 : f32 to vector<8x128xf32>
    %130 = arith.subf %129, %5 : vector<8x128xf32>
    %cst_78 = arith.constant -1.900000e+01 : f32
    %131 = vector.broadcast %cst_78 : f32 to vector<8x128xf32>
    %132 = arith.addf %131, %5 : vector<8x128xf32>
    %133 = arith.minimumf %130, %132 : vector<8x128xf32>
    %cst_79 = arith.constant 0.000000e+00 : f32
    %134 = vector.broadcast %cst_79 : f32 to vector<8x128xf32>
    %135 = arith.maximumf %133, %134 : vector<8x128xf32>
    %136 = arith.mulf %135, %6 : vector<8x128xf32>
    %cst_80 = arith.constant 2.100000e+01 : f32
    %137 = vector.broadcast %cst_80 : f32 to vector<8x128xf32>
    %138 = arith.subf %137, %9 : vector<8x128xf32>
    %cst_81 = arith.constant -1.900000e+01 : f32
    %139 = vector.broadcast %cst_81 : f32 to vector<8x128xf32>
    %140 = arith.addf %139, %9 : vector<8x128xf32>
    %141 = arith.minimumf %138, %140 : vector<8x128xf32>
    %cst_82 = arith.constant 0.000000e+00 : f32
    %142 = vector.broadcast %cst_82 : f32 to vector<8x128xf32>
    %143 = arith.maximumf %141, %142 : vector<8x128xf32>
    %144 = arith.mulf %143, %10 : vector<8x128xf32>
    %145 = arith.addf %135, %143 : vector<8x128xf32>
    %146 = arith.addf %136, %144 : vector<8x128xf32>
    %c4 = arith.constant 4 : index
    %c0_83 = arith.constant 0 : index
    %c0_84 = arith.constant 0 : index
    %147 = vector.load %arg5[%c4, %c0_83, %c0_84] : memref<25x8x128xf32, #tpu.memory_space<vmem>>, vector<1x8x128xf32>
    %148 = vector.shape_cast %147 : vector<1x8x128xf32> to vector<8x128xf32>
    %149 = arith.addf %148, %145 : vector<8x128xf32>
    %c4_85 = arith.constant 4 : index
    %c0_86 = arith.constant 0 : index
    %c0_87 = arith.constant 0 : index
    %150 = vector.load %arg5[%c4_85, %c0_86, %c0_87] : memref<25x8x128xf32, #tpu.memory_space<vmem>>, vector<1x8x128xf32>
    %151 = vector.shape_cast %150 : vector<1x8x128xf32> to vector<8x128xf32>
    %152 = vector.shape_cast %149 : vector<8x128xf32> to vector<1x8x128xf32>
    tpu.vector_store %arg5[%c4_85, %c0_86, %c0_87], %152 {strides = array<i32>} : memref<25x8x128xf32, #tpu.memory_space<vmem>>, vector<1x8x128xf32>,
    %c4_88 = arith.constant 4 : index
    %c0_89 = arith.constant 0 : index
    %c0_90 = arith.constant 0 : index
    %153 = vector.load %arg6[%c4_88, %c0_89, %c0_90] : memref<25x8x128xf32, #tpu.memory_space<vmem>>, vector<1x8x128xf32>
    %154 = vector.shape_cast %153 : vector<1x8x128xf32> to vector<8x128xf32>
    %155 = arith.addf %154, %146 : vector<8x128xf32>
    %c4_91 = arith.constant 4 : index
    %c0_92 = arith.constant 0 : index
    %c0_93 = arith.constant 0 : index
    %156 = vector.load %arg6[%c4_91, %c0_92, %c0_93] : memref<25x8x128xf32, #tpu.memory_space<vmem>>, vector<1x8x128xf32>
    %157 = vector.shape_cast %156 : vector<1x8x128xf32> to vector<8x128xf32>
    %158 = vector.shape_cast %155 : vector<8x128xf32> to vector<1x8x128xf32>
    tpu.vector_store %arg6[%c4_91, %c0_92, %c0_93], %158 {strides = array<i32>} : memref<25x8x128xf32, #tpu.memory_space<vmem>>, vector<1x8x128xf32>,
    %cst_94 = arith.constant 2.000000e+01 : f32
    %159 = vector.broadcast %cst_94 : f32 to vector<8x128xf32>
    %160 = arith.subf %159, %5 : vector<8x128xf32>
    %cst_95 = arith.constant -1.800000e+01 : f32
    %161 = vector.broadcast %cst_95 : f32 to vector<8x128xf32>
    %162 = arith.addf %161, %5 : vector<8x128xf32>
    %163 = arith.minimumf %160, %162 : vector<8x128xf32>
    %cst_96 = arith.constant 0.000000e+00 : f32
    %164 = vector.broadcast %cst_96 : f32 to vector<8x128xf32>
    %165 = arith.maximumf %163, %164 : vector<8x128xf32>
    %166 = arith.mulf %165, %6 : vector<8x128xf32>
    %cst_97 = arith.constant 2.000000e+01 : f32
    %167 = vector.broadcast %cst_97 : f32 to vector<8x128xf32>
    %168 = arith.subf %167, %9 : vector<8x128xf32>
    %cst_98 = arith.constant -1.800000e+01 : f32
    %169 = vector.broadcast %cst_98 : f32 to vector<8x128xf32>
    %170 = arith.addf %169, %9 : vector<8x128xf32>
    %171 = arith.minimumf %168, %170 : vector<8x128xf32>
    %cst_99 = arith.constant 0.000000e+00 : f32
    %172 = vector.broadcast %cst_99 : f32 to vector<8x128xf32>
    %173 = arith.maximumf %171, %172 : vector<8x128xf32>
    %174 = arith.mulf %173, %10 : vector<8x128xf32>
    %175 = arith.addf %165, %173 : vector<8x128xf32>
    %176 = arith.addf %166, %174 : vector<8x128xf32>
    %c5 = arith.constant 5 : index
    %c0_100 = arith.constant 0 : index
    %c0_101 = arith.constant 0 : index
    %177 = vector.load %arg5[%c5, %c0_100, %c0_101] : memref<25x8x128xf32, #tpu.memory_space<vmem>>, vector<1x8x128xf32>
    %178 = vector.shape_cast %177 : vector<1x8x128xf32> to vector<8x128xf32>
    %179 = arith.addf %178, %175 : vector<8x128xf32>
    %c5_102 = arith.constant 5 : index
    %c0_103 = arith.constant 0 : index
    %c0_104 = arith.constant 0 : index
    %180 = vector.load %arg5[%c5_102, %c0_103, %c0_104] : memref<25x8x128xf32, #tpu.memory_space<vmem>>, vector<1x8x128xf32>
    %181 = vector.shape_cast %180 : vector<1x8x128xf32> to vector<8x128xf32>
    %182 = vector.shape_cast %179 : vector<8x128xf32> to vector<1x8x128xf32>
    tpu.vector_store %arg5[%c5_102, %c0_103, %c0_104], %182 {strides = array<i32>} : memref<25x8x128xf32, #tpu.memory_space<vmem>>, vector<1x8x128xf32>,
    %c5_105 = arith.constant 5 : index
    %c0_106 = arith.constant 0 : index
    %c0_107 = arith.constant 0 : index
    %183 = vector.load %arg6[%c5_105, %c0_106, %c0_107] : memref<25x8x128xf32, #tpu.memory_space<vmem>>, vector<1x8x128xf32>
    %184 = vector.shape_cast %183 : vector<1x8x128xf32> to vector<8x128xf32>
    %185 = arith.addf %184, %176 : vector<8x128xf32>
    %c5_108 = arith.constant 5 : index
    %c0_109 = arith.constant 0 : index
    %c0_110 = arith.constant 0 : index
    %186 = vector.load %arg6[%c5_108, %c0_109, %c0_110] : memref<25x8x128xf32, #tpu.memory_space<vmem>>, vector<1x8x128xf32>
    %187 = vector.shape_cast %186 : vector<1x8x128xf32> to vector<8x128xf32>
    %188 = vector.shape_cast %185 : vector<8x128xf32> to vector<1x8x128xf32>
    tpu.vector_store %arg6[%c5_108, %c0_109, %c0_110], %188 {strides = array<i32>} : memref<25x8x128xf32, #tpu.memory_space<vmem>>, vector<1x8x128xf32>,
    %cst_111 = arith.constant 1.900000e+01 : f32
    %189 = vector.broadcast %cst_111 : f32 to vector<8x128xf32>
    %190 = arith.subf %189, %5 : vector<8x128xf32>
    %cst_112 = arith.constant -1.700000e+01 : f32
    %191 = vector.broadcast %cst_112 : f32 to vector<8x128xf32>
    %192 = arith.addf %191, %5 : vector<8x128xf32>
    %193 = arith.minimumf %190, %192 : vector<8x128xf32>
    %cst_113 = arith.constant 0.000000e+00 : f32
    %194 = vector.broadcast %cst_113 : f32 to vector<8x128xf32>
    %195 = arith.maximumf %193, %194 : vector<8x128xf32>
    %196 = arith.mulf %195, %6 : vector<8x128xf32>
    %cst_114 = arith.constant 1.900000e+01 : f32
    %197 = vector.broadcast %cst_114 : f32 to vector<8x128xf32>
    %198 = arith.subf %197, %9 : vector<8x128xf32>
    %cst_115 = arith.constant -1.700000e+01 : f32
    %199 = vector.broadcast %cst_115 : f32 to vector<8x128xf32>
    %200 = arith.addf %199, %9 : vector<8x128xf32>
    %201 = arith.minimumf %198, %200 : vector<8x128xf32>
    %cst_116 = arith.constant 0.000000e+00 : f32
    %202 = vector.broadcast %cst_116 : f32 to vector<8x128xf32>
    %203 = arith.maximumf %201, %202 : vector<8x128xf32>
    %204 = arith.mulf %203, %10 : vector<8x128xf32>
    %205 = arith.addf %195, %203 : vector<8x128xf32>
    %206 = arith.addf %196, %204 : vector<8x128xf32>
    %c6 = arith.constant 6 : index
    %c0_117 = arith.constant 0 : index
    %c0_118 = arith.constant 0 : index
    %207 = vector.load %arg5[%c6, %c0_117, %c0_118] : memref<25x8x128xf32, #tpu.memory_space<vmem>>, vector<1x8x128xf32>
    %208 = vector.shape_cast %207 : vector<1x8x128xf32> to vector<8x128xf32>
    %209 = arith.addf %208, %205 : vector<8x128xf32>
    %c6_119 = arith.constant 6 : index
    %c0_120 = arith.constant 0 : index
    %c0_121 = arith.constant 0 : index
    %210 = vector.load %arg5[%c6_119, %c0_120, %c0_121] : memref<25x8x128xf32, #tpu.memory_space<vmem>>, vector<1x8x128xf32>
    %211 = vector.shape_cast %210 : vector<1x8x128xf32> to vector<8x128xf32>
    %212 = vector.shape_cast %209 : vector<8x128xf32> to vector<1x8x128xf32>
    tpu.vector_store %arg5[%c6_119, %c0_120, %c0_121], %212 {strides = array<i32>} : memref<25x8x128xf32, #tpu.memory_space<vmem>>, vector<1x8x128xf32>,
    %c6_122 = arith.constant 6 : index
    %c0_123 = arith.constant 0 : index
    %c0_124 = arith.constant 0 : index
    %213 = vector.load %arg6[%c6_122, %c0_123, %c0_124] : memref<25x8x128xf32, #tpu.memory_space<vmem>>, vector<1x8x128xf32>
    %214 = vector.shape_cast %213 : vector<1x8x128xf32> to vector<8x128xf32>
    %215 = arith.addf %214, %206 : vector<8x128xf32>
    %c6_125 = arith.constant 6 : index
    %c0_126 = arith.constant 0 : index
    %c0_127 = arith.constant 0 : index
    %216 = vector.load %arg6[%c6_125, %c0_126, %c0_127] : memref<25x8x128xf32, #tpu.memory_space<vmem>>, vector<1x8x128xf32>
    %217 = vector.shape_cast %216 : vector<1x8x128xf32> to vector<8x128xf32>
    %218 = vector.shape_cast %215 : vector<8x128xf32> to vector<1x8x128xf32>
    tpu.vector_store %arg6[%c6_125, %c0_126, %c0_127], %218 {strides = array<i32>} : memref<25x8x128xf32, #tpu.memory_space<vmem>>, vector<1x8x128xf32>,
    %cst_128 = arith.constant 1.800000e+01 : f32
    %219 = vector.broadcast %cst_128 : f32 to vector<8x128xf32>
    %220 = arith.subf %219, %5 : vector<8x128xf32>
    %cst_129 = arith.constant -1.600000e+01 : f32
    %221 = vector.broadcast %cst_129 : f32 to vector<8x128xf32>
    %222 = arith.addf %221, %5 : vector<8x128xf32>
    %223 = arith.minimumf %220, %222 : vector<8x128xf32>
    %cst_130 = arith.constant 0.000000e+00 : f32
    %224 = vector.broadcast %cst_130 : f32 to vector<8x128xf32>
    %225 = arith.maximumf %223, %224 : vector<8x128xf32>
    %226 = arith.mulf %225, %6 : vector<8x128xf32>
    %cst_131 = arith.constant 1.800000e+01 : f32
    %227 = vector.broadcast %cst_131 : f32 to vector<8x128xf32>
    %228 = arith.subf %227, %9 : vector<8x128xf32>
    %cst_132 = arith.constant -1.600000e+01 : f32
    %229 = vector.broadcast %cst_132 : f32 to vector<8x128xf32>
    %230 = arith.addf %229, %9 : vector<8x128xf32>
    %231 = arith.minimumf %228, %230 : vector<8x128xf32>
    %cst_133 = arith.constant 0.000000e+00 : f32
    %232 = vector.broadcast %cst_133 : f32 to vector<8x128xf32>
    %233 = arith.maximumf %231, %232 : vector<8x128xf32>
    %234 = arith.mulf %233, %10 : vector<8x128xf32>
    %235 = arith.addf %225, %233 : vector<8x128xf32>
    %236 = arith.addf %226, %234 : vector<8x128xf32>
    %c7 = arith.constant 7 : index
    %c0_134 = arith.constant 0 : index
    %c0_135 = arith.constant 0 : index
    %237 = vector.load %arg5[%c7, %c0_134, %c0_135] : memref<25x8x128xf32, #tpu.memory_space<vmem>>, vector<1x8x128xf32>
    %238 = vector.shape_cast %237 : vector<1x8x128xf32> to vector<8x128xf32>
    %239 = arith.addf %238, %235 : vector<8x128xf32>
    %c7_136 = arith.constant 7 : index
    %c0_137 = arith.constant 0 : index
    %c0_138 = arith.constant 0 : index
    %240 = vector.load %arg5[%c7_136, %c0_137, %c0_138] : memref<25x8x128xf32, #tpu.memory_space<vmem>>, vector<1x8x128xf32>
    %241 = vector.shape_cast %240 : vector<1x8x128xf32> to vector<8x128xf32>
    %242 = vector.shape_cast %239 : vector<8x128xf32> to vector<1x8x128xf32>
    tpu.vector_store %arg5[%c7_136, %c0_137, %c0_138], %242 {strides = array<i32>} : memref<25x8x128xf32, #tpu.memory_space<vmem>>, vector<1x8x128xf32>,
    %c7_139 = arith.constant 7 : index
    %c0_140 = arith.constant 0 : index
    %c0_141 = arith.constant 0 : index
    %243 = vector.load %arg6[%c7_139, %c0_140, %c0_141] : memref<25x8x128xf32, #tpu.memory_space<vmem>>, vector<1x8x128xf32>
    %244 = vector.shape_cast %243 : vector<1x8x128xf32> to vector<8x128xf32>
    %245 = arith.addf %244, %236 : vector<8x128xf32>
    %c7_142 = arith.constant 7 : index
    %c0_143 = arith.constant 0 : index
    %c0_144 = arith.constant 0 : index
    %246 = vector.load %arg6[%c7_142, %c0_143, %c0_144] : memref<25x8x128xf32, #tpu.memory_space<vmem>>, vector<1x8x128xf32>
    %247 = vector.shape_cast %246 : vector<1x8x128xf32> to vector<8x128xf32>
    %248 = vector.shape_cast %245 : vector<8x128xf32> to vector<1x8x128xf32>
    tpu.vector_store %arg6[%c7_142, %c0_143, %c0_144], %248 {strides = array<i32>} : memref<25x8x128xf32, #tpu.memory_space<vmem>>, vector<1x8x128xf32>,
    %cst_145 = arith.constant 1.700000e+01 : f32
    %249 = vector.broadcast %cst_145 : f32 to vector<8x128xf32>
    %250 = arith.subf %249, %5 : vector<8x128xf32>
    %cst_146 = arith.constant -1.500000e+01 : f32
    %251 = vector.broadcast %cst_146 : f32 to vector<8x128xf32>
    %252 = arith.addf %251, %5 : vector<8x128xf32>
    %253 = arith.minimumf %250, %252 : vector<8x128xf32>
    %cst_147 = arith.constant 0.000000e+00 : f32
    %254 = vector.broadcast %cst_147 : f32 to vector<8x128xf32>
    %255 = arith.maximumf %253, %254 : vector<8x128xf32>
    %256 = arith.mulf %255, %6 : vector<8x128xf32>
    %cst_148 = arith.constant 1.700000e+01 : f32
    %257 = vector.broadcast %cst_148 : f32 to vector<8x128xf32>
    %258 = arith.subf %257, %9 : vector<8x128xf32>
    %cst_149 = arith.constant -1.500000e+01 : f32
    %259 = vector.broadcast %cst_149 : f32 to vector<8x128xf32>
    %260 = arith.addf %259, %9 : vector<8x128xf32>
    %261 = arith.minimumf %258, %260 : vector<8x128xf32>
    %cst_150 = arith.constant 0.000000e+00 : f32
    %262 = vector.broadcast %cst_150 : f32 to vector<8x128xf32>
    %263 = arith.maximumf %261, %262 : vector<8x128xf32>
    %264 = arith.mulf %263, %10 : vector<8x128xf32>
    %265 = arith.addf %255, %263 : vector<8x128xf32>
    %266 = arith.addf %256, %264 : vector<8x128xf32>
    %c8 = arith.constant 8 : index
    %c0_151 = arith.constant 0 : index
    %c0_152 = arith.constant 0 : index
    %267 = vector.load %arg5[%c8, %c0_151, %c0_152] : memref<25x8x128xf32, #tpu.memory_space<vmem>>, vector<1x8x128xf32>
    %268 = vector.shape_cast %267 : vector<1x8x128xf32> to vector<8x128xf32>
    %269 = arith.addf %268, %265 : vector<8x128xf32>
    %c8_153 = arith.constant 8 : index
    %c0_154 = arith.constant 0 : index
    %c0_155 = arith.constant 0 : index
    %270 = vector.load %arg5[%c8_153, %c0_154, %c0_155] : memref<25x8x128xf32, #tpu.memory_space<vmem>>, vector<1x8x128xf32>
    %271 = vector.shape_cast %270 : vector<1x8x128xf32> to vector<8x128xf32>
    %272 = vector.shape_cast %269 : vector<8x128xf32> to vector<1x8x128xf32>
    tpu.vector_store %arg5[%c8_153, %c0_154, %c0_155], %272 {strides = array<i32>} : memref<25x8x128xf32, #tpu.memory_space<vmem>>, vector<1x8x128xf32>,
    %c8_156 = arith.constant 8 : index
    %c0_157 = arith.constant 0 : index
    %c0_158 = arith.constant 0 : index
    %273 = vector.load %arg6[%c8_156, %c0_157, %c0_158] : memref<25x8x128xf32, #tpu.memory_space<vmem>>, vector<1x8x128xf32>
    %274 = vector.shape_cast %273 : vector<1x8x128xf32> to vector<8x128xf32>
    %275 = arith.addf %274, %266 : vector<8x128xf32>
    %c8_159 = arith.constant 8 : index
    %c0_160 = arith.constant 0 : index
    %c0_161 = arith.constant 0 : index
    %276 = vector.load %arg6[%c8_159, %c0_160, %c0_161] : memref<25x8x128xf32, #tpu.memory_space<vmem>>, vector<1x8x128xf32>
    %277 = vector.shape_cast %276 : vector<1x8x128xf32> to vector<8x128xf32>
    %278 = vector.shape_cast %275 : vector<8x128xf32> to vector<1x8x128xf32>
    tpu.vector_store %arg6[%c8_159, %c0_160, %c0_161], %278 {strides = array<i32>} : memref<25x8x128xf32, #tpu.memory_space<vmem>>, vector<1x8x128xf32>,
    %cst_162 = arith.constant 1.600000e+01 : f32
    %279 = vector.broadcast %cst_162 : f32 to vector<8x128xf32>
    %280 = arith.subf %279, %5 : vector<8x128xf32>
    %cst_163 = arith.constant -1.400000e+01 : f32
    %281 = vector.broadcast %cst_163 : f32 to vector<8x128xf32>
    %282 = arith.addf %281, %5 : vector<8x128xf32>
    %283 = arith.minimumf %280, %282 : vector<8x128xf32>
    %cst_164 = arith.constant 0.000000e+00 : f32
    %284 = vector.broadcast %cst_164 : f32 to vector<8x128xf32>
    %285 = arith.maximumf %283, %284 : vector<8x128xf32>
    %286 = arith.mulf %285, %6 : vector<8x128xf32>
    %cst_165 = arith.constant 1.600000e+01 : f32
    %287 = vector.broadcast %cst_165 : f32 to vector<8x128xf32>
    %288 = arith.subf %287, %9 : vector<8x128xf32>
    %cst_166 = arith.constant -1.400000e+01 : f32
    %289 = vector.broadcast %cst_166 : f32 to vector<8x128xf32>
    %290 = arith.addf %289, %9 : vector<8x128xf32>
    %291 = arith.minimumf %288, %290 : vector<8x128xf32>
    %cst_167 = arith.constant 0.000000e+00 : f32
    %292 = vector.broadcast %cst_167 : f32 to vector<8x128xf32>
    %293 = arith.maximumf %291, %292 : vector<8x128xf32>
    %294 = arith.mulf %293, %10 : vector<8x128xf32>
    %295 = arith.addf %285, %293 : vector<8x128xf32>
    %296 = arith.addf %286, %294 : vector<8x128xf32>
    %c9 = arith.constant 9 : index
    %c0_168 = arith.constant 0 : index
    %c0_169 = arith.constant 0 : index
    %297 = vector.load %arg5[%c9, %c0_168, %c0_169] : memref<25x8x128xf32, #tpu.memory_space<vmem>>, vector<1x8x128xf32>
    %298 = vector.shape_cast %297 : vector<1x8x128xf32> to vector<8x128xf32>
    %299 = arith.addf %298, %295 : vector<8x128xf32>
    %c9_170 = arith.constant 9 : index
    %c0_171 = arith.constant 0 : index
    %c0_172 = arith.constant 0 : index
    %300 = vector.load %arg5[%c9_170, %c0_171, %c0_172] : memref<25x8x128xf32, #tpu.memory_space<vmem>>, vector<1x8x128xf32>
    %301 = vector.shape_cast %300 : vector<1x8x128xf32> to vector<8x128xf32>
    %302 = vector.shape_cast %299 : vector<8x128xf32> to vector<1x8x128xf32>
    tpu.vector_store %arg5[%c9_170, %c0_171, %c0_172], %302 {strides = array<i32>} : memref<25x8x128xf32, #tpu.memory_space<vmem>>, vector<1x8x128xf32>,
    %c9_173 = arith.constant 9 : index
    %c0_174 = arith.constant 0 : index
    %c0_175 = arith.constant 0 : index
    %303 = vector.load %arg6[%c9_173, %c0_174, %c0_175] : memref<25x8x128xf32, #tpu.memory_space<vmem>>, vector<1x8x128xf32>
    %304 = vector.shape_cast %303 : vector<1x8x128xf32> to vector<8x128xf32>
    %305 = arith.addf %304, %296 : vector<8x128xf32>
    %c9_176 = arith.constant 9 : index
    %c0_177 = arith.constant 0 : index
    %c0_178 = arith.constant 0 : index
    %306 = vector.load %arg6[%c9_176, %c0_177, %c0_178] : memref<25x8x128xf32, #tpu.memory_space<vmem>>, vector<1x8x128xf32>
    %307 = vector.shape_cast %306 : vector<1x8x128xf32> to vector<8x128xf32>
    %308 = vector.shape_cast %305 : vector<8x128xf32> to vector<1x8x128xf32>
    tpu.vector_store %arg6[%c9_176, %c0_177, %c0_178], %308 {strides = array<i32>} : memref<25x8x128xf32, #tpu.memory_space<vmem>>, vector<1x8x128xf32>,
    %cst_179 = arith.constant 1.500000e+01 : f32
    %309 = vector.broadcast %cst_179 : f32 to vector<8x128xf32>
    %310 = arith.subf %309, %5 : vector<8x128xf32>
    %cst_180 = arith.constant -1.300000e+01 : f32
    %311 = vector.broadcast %cst_180 : f32 to vector<8x128xf32>
    %312 = arith.addf %311, %5 : vector<8x128xf32>
    %313 = arith.minimumf %310, %312 : vector<8x128xf32>
    %cst_181 = arith.constant 0.000000e+00 : f32
    %314 = vector.broadcast %cst_181 : f32 to vector<8x128xf32>
    %315 = arith.maximumf %313, %314 : vector<8x128xf32>
    %316 = arith.mulf %315, %6 : vector<8x128xf32>
    %cst_182 = arith.constant 1.500000e+01 : f32
    %317 = vector.broadcast %cst_182 : f32 to vector<8x128xf32>
    %318 = arith.subf %317, %9 : vector<8x128xf32>
    %cst_183 = arith.constant -1.300000e+01 : f32
    %319 = vector.broadcast %cst_183 : f32 to vector<8x128xf32>
    %320 = arith.addf %319, %9 : vector<8x128xf32>
    %321 = arith.minimumf %318, %320 : vector<8x128xf32>
    %cst_184 = arith.constant 0.000000e+00 : f32
    %322 = vector.broadcast %cst_184 : f32 to vector<8x128xf32>
    %323 = arith.maximumf %321, %322 : vector<8x128xf32>
    %324 = arith.mulf %323, %10 : vector<8x128xf32>
    %325 = arith.addf %315, %323 : vector<8x128xf32>
    %326 = arith.addf %316, %324 : vector<8x128xf32>
    %c10 = arith.constant 10 : index
    %c0_185 = arith.constant 0 : index
    %c0_186 = arith.constant 0 : index
    %327 = vector.load %arg5[%c10, %c0_185, %c0_186] : memref<25x8x128xf32, #tpu.memory_space<vmem>>, vector<1x8x128xf32>
    %328 = vector.shape_cast %327 : vector<1x8x128xf32> to vector<8x128xf32>
    %329 = arith.addf %328, %325 : vector<8x128xf32>
    %c10_187 = arith.constant 10 : index
    %c0_188 = arith.constant 0 : index
    %c0_189 = arith.constant 0 : index
    %330 = vector.load %arg5[%c10_187, %c0_188, %c0_189] : memref<25x8x128xf32, #tpu.memory_space<vmem>>, vector<1x8x128xf32>
    %331 = vector.shape_cast %330 : vector<1x8x128xf32> to vector<8x128xf32>
    %332 = vector.shape_cast %329 : vector<8x128xf32> to vector<1x8x128xf32>
    tpu.vector_store %arg5[%c10_187, %c0_188, %c0_189], %332 {strides = array<i32>} : memref<25x8x128xf32, #tpu.memory_space<vmem>>, vector<1x8x128xf32>,
    %c10_190 = arith.constant 10 : index
    %c0_191 = arith.constant 0 : index
    %c0_192 = arith.constant 0 : index
    %333 = vector.load %arg6[%c10_190, %c0_191, %c0_192] : memref<25x8x128xf32, #tpu.memory_space<vmem>>, vector<1x8x128xf32>
    %334 = vector.shape_cast %333 : vector<1x8x128xf32> to vector<8x128xf32>
    %335 = arith.addf %334, %326 : vector<8x128xf32>
    %c10_193 = arith.constant 10 : index
    %c0_194 = arith.constant 0 : index
    %c0_195 = arith.constant 0 : index
    %336 = vector.load %arg6[%c10_193, %c0_194, %c0_195] : memref<25x8x128xf32, #tpu.memory_space<vmem>>, vector<1x8x128xf32>
    %337 = vector.shape_cast %336 : vector<1x8x128xf32> to vector<8x128xf32>
    %338 = vector.shape_cast %335 : vector<8x128xf32> to vector<1x8x128xf32>
    tpu.vector_store %arg6[%c10_193, %c0_194, %c0_195], %338 {strides = array<i32>} : memref<25x8x128xf32, #tpu.memory_space<vmem>>, vector<1x8x128xf32>,
    %cst_196 = arith.constant 1.400000e+01 : f32
    %339 = vector.broadcast %cst_196 : f32 to vector<8x128xf32>
    %340 = arith.subf %339, %5 : vector<8x128xf32>
    %cst_197 = arith.constant -1.200000e+01 : f32
    %341 = vector.broadcast %cst_197 : f32 to vector<8x128xf32>
    %342 = arith.addf %341, %5 : vector<8x128xf32>
    %343 = arith.minimumf %340, %342 : vector<8x128xf32>
    %cst_198 = arith.constant 0.000000e+00 : f32
    %344 = vector.broadcast %cst_198 : f32 to vector<8x128xf32>
    %345 = arith.maximumf %343, %344 : vector<8x128xf32>
    %346 = arith.mulf %345, %6 : vector<8x128xf32>
    %cst_199 = arith.constant 1.400000e+01 : f32
    %347 = vector.broadcast %cst_199 : f32 to vector<8x128xf32>
    %348 = arith.subf %347, %9 : vector<8x128xf32>
    %cst_200 = arith.constant -1.200000e+01 : f32
    %349 = vector.broadcast %cst_200 : f32 to vector<8x128xf32>
    %350 = arith.addf %349, %9 : vector<8x128xf32>
    %351 = arith.minimumf %348, %350 : vector<8x128xf32>
    %cst_201 = arith.constant 0.000000e+00 : f32
    %352 = vector.broadcast %cst_201 : f32 to vector<8x128xf32>
    %353 = arith.maximumf %351, %352 : vector<8x128xf32>
    %354 = arith.mulf %353, %10 : vector<8x128xf32>
    %355 = arith.addf %345, %353 : vector<8x128xf32>
    %356 = arith.addf %346, %354 : vector<8x128xf32>
    %c11 = arith.constant 11 : index
    %c0_202 = arith.constant 0 : index
    %c0_203 = arith.constant 0 : index
    %357 = vector.load %arg5[%c11, %c0_202, %c0_203] : memref<25x8x128xf32, #tpu.memory_space<vmem>>, vector<1x8x128xf32>
    %358 = vector.shape_cast %357 : vector<1x8x128xf32> to vector<8x128xf32>
    %359 = arith.addf %358, %355 : vector<8x128xf32>
    %c11_204 = arith.constant 11 : index
    %c0_205 = arith.constant 0 : index
    %c0_206 = arith.constant 0 : index
    %360 = vector.load %arg5[%c11_204, %c0_205, %c0_206] : memref<25x8x128xf32, #tpu.memory_space<vmem>>, vector<1x8x128xf32>
    %361 = vector.shape_cast %360 : vector<1x8x128xf32> to vector<8x128xf32>
    %362 = vector.shape_cast %359 : vector<8x128xf32> to vector<1x8x128xf32>
    tpu.vector_store %arg5[%c11_204, %c0_205, %c0_206], %362 {strides = array<i32>} : memref<25x8x128xf32, #tpu.memory_space<vmem>>, vector<1x8x128xf32>,
    %c11_207 = arith.constant 11 : index
    %c0_208 = arith.constant 0 : index
    %c0_209 = arith.constant 0 : index
    %363 = vector.load %arg6[%c11_207, %c0_208, %c0_209] : memref<25x8x128xf32, #tpu.memory_space<vmem>>, vector<1x8x128xf32>
    %364 = vector.shape_cast %363 : vector<1x8x128xf32> to vector<8x128xf32>
    %365 = arith.addf %364, %356 : vector<8x128xf32>
    %c11_210 = arith.constant 11 : index
    %c0_211 = arith.constant 0 : index
    %c0_212 = arith.constant 0 : index
    %366 = vector.load %arg6[%c11_210, %c0_211, %c0_212] : memref<25x8x128xf32, #tpu.memory_space<vmem>>, vector<1x8x128xf32>
    %367 = vector.shape_cast %366 : vector<1x8x128xf32> to vector<8x128xf32>
    %368 = vector.shape_cast %365 : vector<8x128xf32> to vector<1x8x128xf32>
    tpu.vector_store %arg6[%c11_210, %c0_211, %c0_212], %368 {strides = array<i32>} : memref<25x8x128xf32, #tpu.memory_space<vmem>>, vector<1x8x128xf32>,
    %cst_213 = arith.constant 1.300000e+01 : f32
    %369 = vector.broadcast %cst_213 : f32 to vector<8x128xf32>
    %370 = arith.subf %369, %5 : vector<8x128xf32>
    %cst_214 = arith.constant -1.100000e+01 : f32
    %371 = vector.broadcast %cst_214 : f32 to vector<8x128xf32>
    %372 = arith.addf %371, %5 : vector<8x128xf32>
    %373 = arith.minimumf %370, %372 : vector<8x128xf32>
    %cst_215 = arith.constant 0.000000e+00 : f32
    %374 = vector.broadcast %cst_215 : f32 to vector<8x128xf32>
    %375 = arith.maximumf %373, %374 : vector<8x128xf32>
    %376 = arith.mulf %375, %6 : vector<8x128xf32>
    %cst_216 = arith.constant 1.300000e+01 : f32
    %377 = vector.broadcast %cst_216 : f32 to vector<8x128xf32>
    %378 = arith.subf %377, %9 : vector<8x128xf32>
    %cst_217 = arith.constant -1.100000e+01 : f32
    %379 = vector.broadcast %cst_217 : f32 to vector<8x128xf32>
    %380 = arith.addf %379, %9 : vector<8x128xf32>
    %381 = arith.minimumf %378, %380 : vector<8x128xf32>
    %cst_218 = arith.constant 0.000000e+00 : f32
    %382 = vector.broadcast %cst_218 : f32 to vector<8x128xf32>
    %383 = arith.maximumf %381, %382 : vector<8x128xf32>
    %384 = arith.mulf %383, %10 : vector<8x128xf32>
    %385 = arith.addf %375, %383 : vector<8x128xf32>
    %386 = arith.addf %376, %384 : vector<8x128xf32>
    %c12 = arith.constant 12 : index
    %c0_219 = arith.constant 0 : index
    %c0_220 = arith.constant 0 : index
    %387 = vector.load %arg5[%c12, %c0_219, %c0_220] : memref<25x8x128xf32, #tpu.memory_space<vmem>>, vector<1x8x128xf32>
    %388 = vector.shape_cast %387 : vector<1x8x128xf32> to vector<8x128xf32>
    %389 = arith.addf %388, %385 : vector<8x128xf32>
    %c12_221 = arith.constant 12 : index
    %c0_222 = arith.constant 0 : index
    %c0_223 = arith.constant 0 : index
    %390 = vector.load %arg5[%c12_221, %c0_222, %c0_223] : memref<25x8x128xf32, #tpu.memory_space<vmem>>, vector<1x8x128xf32>
    %391 = vector.shape_cast %390 : vector<1x8x128xf32> to vector<8x128xf32>
    %392 = vector.shape_cast %389 : vector<8x128xf32> to vector<1x8x128xf32>
    tpu.vector_store %arg5[%c12_221, %c0_222, %c0_223], %392 {strides = array<i32>} : memref<25x8x128xf32, #tpu.memory_space<vmem>>, vector<1x8x128xf32>,
    %c12_224 = arith.constant 12 : index
    %c0_225 = arith.constant 0 : index
    %c0_226 = arith.constant 0 : index
    %393 = vector.load %arg6[%c12_224, %c0_225, %c0_226] : memref<25x8x128xf32, #tpu.memory_space<vmem>>, vector<1x8x128xf32>
    %394 = vector.shape_cast %393 : vector<1x8x128xf32> to vector<8x128xf32>
    %395 = arith.addf %394, %386 : vector<8x128xf32>
    %c12_227 = arith.constant 12 : index
    %c0_228 = arith.constant 0 : index
    %c0_229 = arith.constant 0 : index
    %396 = vector.load %arg6[%c12_227, %c0_228, %c0_229] : memref<25x8x128xf32, #tpu.memory_space<vmem>>, vector<1x8x128xf32>
    %397 = vector.shape_cast %396 : vector<1x8x128xf32> to vector<8x128xf32>
    %398 = vector.shape_cast %395 : vector<8x128xf32> to vector<1x8x128xf32>
    tpu.vector_store %arg6[%c12_227, %c0_228, %c0_229], %398 {strides = array<i32>} : memref<25x8x128xf32, #tpu.memory_space<vmem>>, vector<1x8x128xf32>,
    %cst_230 = arith.constant 1.200000e+01 : f32
    %399 = vector.broadcast %cst_230 : f32 to vector<8x128xf32>
    %400 = arith.subf %399, %5 : vector<8x128xf32>
    %cst_231 = arith.constant -1.000000e+01 : f32
    %401 = vector.broadcast %cst_231 : f32 to vector<8x128xf32>
    %402 = arith.addf %401, %5 : vector<8x128xf32>
    %403 = arith.minimumf %400, %402 : vector<8x128xf32>
    %cst_232 = arith.constant 0.000000e+00 : f32
    %404 = vector.broadcast %cst_232 : f32 to vector<8x128xf32>
    %405 = arith.maximumf %403, %404 : vector<8x128xf32>
    %406 = arith.mulf %405, %6 : vector<8x128xf32>
    %cst_233 = arith.constant 1.200000e+01 : f32
    %407 = vector.broadcast %cst_233 : f32 to vector<8x128xf32>
    %408 = arith.subf %407, %9 : vector<8x128xf32>
    %cst_234 = arith.constant -1.000000e+01 : f32
    %409 = vector.broadcast %cst_234 : f32 to vector<8x128xf32>
    %410 = arith.addf %409, %9 : vector<8x128xf32>
    %411 = arith.minimumf %408, %410 : vector<8x128xf32>
    %cst_235 = arith.constant 0.000000e+00 : f32
    %412 = vector.broadcast %cst_235 : f32 to vector<8x128xf32>
    %413 = arith.maximumf %411, %412 : vector<8x128xf32>
    %414 = arith.mulf %413, %10 : vector<8x128xf32>
    %415 = arith.addf %405, %413 : vector<8x128xf32>
    %416 = arith.addf %406, %414 : vector<8x128xf32>
    %c13 = arith.constant 13 : index
    %c0_236 = arith.constant 0 : index
    %c0_237 = arith.constant 0 : index
    %417 = vector.load %arg5[%c13, %c0_236, %c0_237] : memref<25x8x128xf32, #tpu.memory_space<vmem>>, vector<1x8x128xf32>
    %418 = vector.shape_cast %417 : vector<1x8x128xf32> to vector<8x128xf32>
    %419 = arith.addf %418, %415 : vector<8x128xf32>
    %c13_238 = arith.constant 13 : index
    %c0_239 = arith.constant 0 : index
    %c0_240 = arith.constant 0 : index
    %420 = vector.load %arg5[%c13_238, %c0_239, %c0_240] : memref<25x8x128xf32, #tpu.memory_space<vmem>>, vector<1x8x128xf32>
    %421 = vector.shape_cast %420 : vector<1x8x128xf32> to vector<8x128xf32>
    %422 = vector.shape_cast %419 : vector<8x128xf32> to vector<1x8x128xf32>
    tpu.vector_store %arg5[%c13_238, %c0_239, %c0_240], %422 {strides = array<i32>} : memref<25x8x128xf32, #tpu.memory_space<vmem>>, vector<1x8x128xf32>,
    %c13_241 = arith.constant 13 : index
    %c0_242 = arith.constant 0 : index
    %c0_243 = arith.constant 0 : index
    %423 = vector.load %arg6[%c13_241, %c0_242, %c0_243] : memref<25x8x128xf32, #tpu.memory_space<vmem>>, vector<1x8x128xf32>
    %424 = vector.shape_cast %423 : vector<1x8x128xf32> to vector<8x128xf32>
    %425 = arith.addf %424, %416 : vector<8x128xf32>
    %c13_244 = arith.constant 13 : index
    %c0_245 = arith.constant 0 : index
    %c0_246 = arith.constant 0 : index
    %426 = vector.load %arg6[%c13_244, %c0_245, %c0_246] : memref<25x8x128xf32, #tpu.memory_space<vmem>>, vector<1x8x128xf32>
    %427 = vector.shape_cast %426 : vector<1x8x128xf32> to vector<8x128xf32>
    %428 = vector.shape_cast %425 : vector<8x128xf32> to vector<1x8x128xf32>
    tpu.vector_store %arg6[%c13_244, %c0_245, %c0_246], %428 {strides = array<i32>} : memref<25x8x128xf32, #tpu.memory_space<vmem>>, vector<1x8x128xf32>,
    %cst_247 = arith.constant 1.100000e+01 : f32
    %429 = vector.broadcast %cst_247 : f32 to vector<8x128xf32>
    %430 = arith.subf %429, %5 : vector<8x128xf32>
    %cst_248 = arith.constant -9.000000e+00 : f32
    %431 = vector.broadcast %cst_248 : f32 to vector<8x128xf32>
    %432 = arith.addf %431, %5 : vector<8x128xf32>
    %433 = arith.minimumf %430, %432 : vector<8x128xf32>
    %cst_249 = arith.constant 0.000000e+00 : f32
    %434 = vector.broadcast %cst_249 : f32 to vector<8x128xf32>
    %435 = arith.maximumf %433, %434 : vector<8x128xf32>
    %436 = arith.mulf %435, %6 : vector<8x128xf32>
    %cst_250 = arith.constant 1.100000e+01 : f32
    %437 = vector.broadcast %cst_250 : f32 to vector<8x128xf32>
    %438 = arith.subf %437, %9 : vector<8x128xf32>
    %cst_251 = arith.constant -9.000000e+00 : f32
    %439 = vector.broadcast %cst_251 : f32 to vector<8x128xf32>
    %440 = arith.addf %439, %9 : vector<8x128xf32>
    %441 = arith.minimumf %438, %440 : vector<8x128xf32>
    %cst_252 = arith.constant 0.000000e+00 : f32
    %442 = vector.broadcast %cst_252 : f32 to vector<8x128xf32>
    %443 = arith.maximumf %441, %442 : vector<8x128xf32>
    %444 = arith.mulf %443, %10 : vector<8x128xf32>
    %445 = arith.addf %435, %443 : vector<8x128xf32>
    %446 = arith.addf %436, %444 : vector<8x128xf32>
    %c14 = arith.constant 14 : index
    %c0_253 = arith.constant 0 : index
    %c0_254 = arith.constant 0 : index
    %447 = vector.load %arg5[%c14, %c0_253, %c0_254] : memref<25x8x128xf32, #tpu.memory_space<vmem>>, vector<1x8x128xf32>
    %448 = vector.shape_cast %447 : vector<1x8x128xf32> to vector<8x128xf32>
    %449 = arith.addf %448, %445 : vector<8x128xf32>
    %c14_255 = arith.constant 14 : index
    %c0_256 = arith.constant 0 : index
    %c0_257 = arith.constant 0 : index
    %450 = vector.load %arg5[%c14_255, %c0_256, %c0_257] : memref<25x8x128xf32, #tpu.memory_space<vmem>>, vector<1x8x128xf32>
    %451 = vector.shape_cast %450 : vector<1x8x128xf32> to vector<8x128xf32>
    %452 = vector.shape_cast %449 : vector<8x128xf32> to vector<1x8x128xf32>
    tpu.vector_store %arg5[%c14_255, %c0_256, %c0_257], %452 {strides = array<i32>} : memref<25x8x128xf32, #tpu.memory_space<vmem>>, vector<1x8x128xf32>,
    %c14_258 = arith.constant 14 : index
    %c0_259 = arith.constant 0 : index
    %c0_260 = arith.constant 0 : index
    %453 = vector.load %arg6[%c14_258, %c0_259, %c0_260] : memref<25x8x128xf32, #tpu.memory_space<vmem>>, vector<1x8x128xf32>
    %454 = vector.shape_cast %453 : vector<1x8x128xf32> to vector<8x128xf32>
    %455 = arith.addf %454, %446 : vector<8x128xf32>
    %c14_261 = arith.constant 14 : index
    %c0_262 = arith.constant 0 : index
    %c0_263 = arith.constant 0 : index
    %456 = vector.load %arg6[%c14_261, %c0_262, %c0_263] : memref<25x8x128xf32, #tpu.memory_space<vmem>>, vector<1x8x128xf32>
    %457 = vector.shape_cast %456 : vector<1x8x128xf32> to vector<8x128xf32>
    %458 = vector.shape_cast %455 : vector<8x128xf32> to vector<1x8x128xf32>
    tpu.vector_store %arg6[%c14_261, %c0_262, %c0_263], %458 {strides = array<i32>} : memref<25x8x128xf32, #tpu.memory_space<vmem>>, vector<1x8x128xf32>,
    %cst_264 = arith.constant 1.000000e+01 : f32
    %459 = vector.broadcast %cst_264 : f32 to vector<8x128xf32>
    %460 = arith.subf %459, %5 : vector<8x128xf32>
    %cst_265 = arith.constant -8.000000e+00 : f32
    %461 = vector.broadcast %cst_265 : f32 to vector<8x128xf32>
    %462 = arith.addf %461, %5 : vector<8x128xf32>
    %463 = arith.minimumf %460, %462 : vector<8x128xf32>
    %cst_266 = arith.constant 0.000000e+00 : f32
    %464 = vector.broadcast %cst_266 : f32 to vector<8x128xf32>
    %465 = arith.maximumf %463, %464 : vector<8x128xf32>
    %466 = arith.mulf %465, %6 : vector<8x128xf32>
    %cst_267 = arith.constant 1.000000e+01 : f32
    %467 = vector.broadcast %cst_267 : f32 to vector<8x128xf32>
    %468 = arith.subf %467, %9 : vector<8x128xf32>
    %cst_268 = arith.constant -8.000000e+00 : f32
    %469 = vector.broadcast %cst_268 : f32 to vector<8x128xf32>
    %470 = arith.addf %469, %9 : vector<8x128xf32>
    %471 = arith.minimumf %468, %470 : vector<8x128xf32>
    %cst_269 = arith.constant 0.000000e+00 : f32
    %472 = vector.broadcast %cst_269 : f32 to vector<8x128xf32>
    %473 = arith.maximumf %471, %472 : vector<8x128xf32>
    %474 = arith.mulf %473, %10 : vector<8x128xf32>
    %475 = arith.addf %465, %473 : vector<8x128xf32>
    %476 = arith.addf %466, %474 : vector<8x128xf32>
    %c15 = arith.constant 15 : index
    %c0_270 = arith.constant 0 : index
    %c0_271 = arith.constant 0 : index
    %477 = vector.load %arg5[%c15, %c0_270, %c0_271] : memref<25x8x128xf32, #tpu.memory_space<vmem>>, vector<1x8x128xf32>
    %478 = vector.shape_cast %477 : vector<1x8x128xf32> to vector<8x128xf32>
    %479 = arith.addf %478, %475 : vector<8x128xf32>
    %c15_272 = arith.constant 15 : index
    %c0_273 = arith.constant 0 : index
    %c0_274 = arith.constant 0 : index
    %480 = vector.load %arg5[%c15_272, %c0_273, %c0_274] : memref<25x8x128xf32, #tpu.memory_space<vmem>>, vector<1x8x128xf32>
    %481 = vector.shape_cast %480 : vector<1x8x128xf32> to vector<8x128xf32>
    %482 = vector.shape_cast %479 : vector<8x128xf32> to vector<1x8x128xf32>
    tpu.vector_store %arg5[%c15_272, %c0_273, %c0_274], %482 {strides = array<i32>} : memref<25x8x128xf32, #tpu.memory_space<vmem>>, vector<1x8x128xf32>,
    %c15_275 = arith.constant 15 : index
    %c0_276 = arith.constant 0 : index
    %c0_277 = arith.constant 0 : index
    %483 = vector.load %arg6[%c15_275, %c0_276, %c0_277] : memref<25x8x128xf32, #tpu.memory_space<vmem>>, vector<1x8x128xf32>
    %484 = vector.shape_cast %483 : vector<1x8x128xf32> to vector<8x128xf32>
    %485 = arith.addf %484, %476 : vector<8x128xf32>
    %c15_278 = arith.constant 15 : index
    %c0_279 = arith.constant 0 : index
    %c0_280 = arith.constant 0 : index
    %486 = vector.load %arg6[%c15_278, %c0_279, %c0_280] : memref<25x8x128xf32, #tpu.memory_space<vmem>>, vector<1x8x128xf32>
    %487 = vector.shape_cast %486 : vector<1x8x128xf32> to vector<8x128xf32>
    %488 = vector.shape_cast %485 : vector<8x128xf32> to vector<1x8x128xf32>
    tpu.vector_store %arg6[%c15_278, %c0_279, %c0_280], %488 {strides = array<i32>} : memref<25x8x128xf32, #tpu.memory_space<vmem>>, vector<1x8x128xf32>,
    %cst_281 = arith.constant 9.000000e+00 : f32
    %489 = vector.broadcast %cst_281 : f32 to vector<8x128xf32>
    %490 = arith.subf %489, %5 : vector<8x128xf32>
    %cst_282 = arith.constant -7.000000e+00 : f32
    %491 = vector.broadcast %cst_282 : f32 to vector<8x128xf32>
    %492 = arith.addf %491, %5 : vector<8x128xf32>
    %493 = arith.minimumf %490, %492 : vector<8x128xf32>
    %cst_283 = arith.constant 0.000000e+00 : f32
    %494 = vector.broadcast %cst_283 : f32 to vector<8x128xf32>
    %495 = arith.maximumf %493, %494 : vector<8x128xf32>
    %496 = arith.mulf %495, %6 : vector<8x128xf32>
    %cst_284 = arith.constant 9.000000e+00 : f32
    %497 = vector.broadcast %cst_284 : f32 to vector<8x128xf32>
    %498 = arith.subf %497, %9 : vector<8x128xf32>
    %cst_285 = arith.constant -7.000000e+00 : f32
    %499 = vector.broadcast %cst_285 : f32 to vector<8x128xf32>
    %500 = arith.addf %499, %9 : vector<8x128xf32>
    %501 = arith.minimumf %498, %500 : vector<8x128xf32>
    %cst_286 = arith.constant 0.000000e+00 : f32
    %502 = vector.broadcast %cst_286 : f32 to vector<8x128xf32>
    %503 = arith.maximumf %501, %502 : vector<8x128xf32>
    %504 = arith.mulf %503, %10 : vector<8x128xf32>
    %505 = arith.addf %495, %503 : vector<8x128xf32>
    %506 = arith.addf %496, %504 : vector<8x128xf32>
    %c16 = arith.constant 16 : index
    %c0_287 = arith.constant 0 : index
    %c0_288 = arith.constant 0 : index
    %507 = vector.load %arg5[%c16, %c0_287, %c0_288] : memref<25x8x128xf32, #tpu.memory_space<vmem>>, vector<1x8x128xf32>
    %508 = vector.shape_cast %507 : vector<1x8x128xf32> to vector<8x128xf32>
    %509 = arith.addf %508, %505 : vector<8x128xf32>
    %c16_289 = arith.constant 16 : index
    %c0_290 = arith.constant 0 : index
    %c0_291 = arith.constant 0 : index
    %510 = vector.load %arg5[%c16_289, %c0_290, %c0_291] : memref<25x8x128xf32, #tpu.memory_space<vmem>>, vector<1x8x128xf32>
    %511 = vector.shape_cast %510 : vector<1x8x128xf32> to vector<8x128xf32>
    %512 = vector.shape_cast %509 : vector<8x128xf32> to vector<1x8x128xf32>
    tpu.vector_store %arg5[%c16_289, %c0_290, %c0_291], %512 {strides = array<i32>} : memref<25x8x128xf32, #tpu.memory_space<vmem>>, vector<1x8x128xf32>,
    %c16_292 = arith.constant 16 : index
    %c0_293 = arith.constant 0 : index
    %c0_294 = arith.constant 0 : index
    %513 = vector.load %arg6[%c16_292, %c0_293, %c0_294] : memref<25x8x128xf32, #tpu.memory_space<vmem>>, vector<1x8x128xf32>
    %514 = vector.shape_cast %513 : vector<1x8x128xf32> to vector<8x128xf32>
    %515 = arith.addf %514, %506 : vector<8x128xf32>
    %c16_295 = arith.constant 16 : index
    %c0_296 = arith.constant 0 : index
    %c0_297 = arith.constant 0 : index
    %516 = vector.load %arg6[%c16_295, %c0_296, %c0_297] : memref<25x8x128xf32, #tpu.memory_space<vmem>>, vector<1x8x128xf32>
    %517 = vector.shape_cast %516 : vector<1x8x128xf32> to vector<8x128xf32>
    %518 = vector.shape_cast %515 : vector<8x128xf32> to vector<1x8x128xf32>
    tpu.vector_store %arg6[%c16_295, %c0_296, %c0_297], %518 {strides = array<i32>} : memref<25x8x128xf32, #tpu.memory_space<vmem>>, vector<1x8x128xf32>,
    %cst_298 = arith.constant 8.000000e+00 : f32
    %519 = vector.broadcast %cst_298 : f32 to vector<8x128xf32>
    %520 = arith.subf %519, %5 : vector<8x128xf32>
    %cst_299 = arith.constant -6.000000e+00 : f32
    %521 = vector.broadcast %cst_299 : f32 to vector<8x128xf32>
    %522 = arith.addf %521, %5 : vector<8x128xf32>
    %523 = arith.minimumf %520, %522 : vector<8x128xf32>
    %cst_300 = arith.constant 0.000000e+00 : f32
    %524 = vector.broadcast %cst_300 : f32 to vector<8x128xf32>
    %525 = arith.maximumf %523, %524 : vector<8x128xf32>
    %526 = arith.mulf %525, %6 : vector<8x128xf32>
    %cst_301 = arith.constant 8.000000e+00 : f32
    %527 = vector.broadcast %cst_301 : f32 to vector<8x128xf32>
    %528 = arith.subf %527, %9 : vector<8x128xf32>
    %cst_302 = arith.constant -6.000000e+00 : f32
    %529 = vector.broadcast %cst_302 : f32 to vector<8x128xf32>
    %530 = arith.addf %529, %9 : vector<8x128xf32>
    %531 = arith.minimumf %528, %530 : vector<8x128xf32>
    %cst_303 = arith.constant 0.000000e+00 : f32
    %532 = vector.broadcast %cst_303 : f32 to vector<8x128xf32>
    %533 = arith.maximumf %531, %532 : vector<8x128xf32>
    %534 = arith.mulf %533, %10 : vector<8x128xf32>
    %535 = arith.addf %525, %533 : vector<8x128xf32>
    %536 = arith.addf %526, %534 : vector<8x128xf32>
    %c17 = arith.constant 17 : index
    %c0_304 = arith.constant 0 : index
    %c0_305 = arith.constant 0 : index
    %537 = vector.load %arg5[%c17, %c0_304, %c0_305] : memref<25x8x128xf32, #tpu.memory_space<vmem>>, vector<1x8x128xf32>
    %538 = vector.shape_cast %537 : vector<1x8x128xf32> to vector<8x128xf32>
    %539 = arith.addf %538, %535 : vector<8x128xf32>
    %c17_306 = arith.constant 17 : index
    %c0_307 = arith.constant 0 : index
    %c0_308 = arith.constant 0 : index
    %540 = vector.load %arg5[%c17_306, %c0_307, %c0_308] : memref<25x8x128xf32, #tpu.memory_space<vmem>>, vector<1x8x128xf32>
    %541 = vector.shape_cast %540 : vector<1x8x128xf32> to vector<8x128xf32>
    %542 = vector.shape_cast %539 : vector<8x128xf32> to vector<1x8x128xf32>
    tpu.vector_store %arg5[%c17_306, %c0_307, %c0_308], %542 {strides = array<i32>} : memref<25x8x128xf32, #tpu.memory_space<vmem>>, vector<1x8x128xf32>,
    %c17_309 = arith.constant 17 : index
    %c0_310 = arith.constant 0 : index
    %c0_311 = arith.constant 0 : index
    %543 = vector.load %arg6[%c17_309, %c0_310, %c0_311] : memref<25x8x128xf32, #tpu.memory_space<vmem>>, vector<1x8x128xf32>
    %544 = vector.shape_cast %543 : vector<1x8x128xf32> to vector<8x128xf32>
    %545 = arith.addf %544, %536 : vector<8x128xf32>
    %c17_312 = arith.constant 17 : index
    %c0_313 = arith.constant 0 : index
    %c0_314 = arith.constant 0 : index
    %546 = vector.load %arg6[%c17_312, %c0_313, %c0_314] : memref<25x8x128xf32, #tpu.memory_space<vmem>>, vector<1x8x128xf32>
    %547 = vector.shape_cast %546 : vector<1x8x128xf32> to vector<8x128xf32>
    %548 = vector.shape_cast %545 : vector<8x128xf32> to vector<1x8x128xf32>
    tpu.vector_store %arg6[%c17_312, %c0_313, %c0_314], %548 {strides = array<i32>} : memref<25x8x128xf32, #tpu.memory_space<vmem>>, vector<1x8x128xf32>,
    %cst_315 = arith.constant 7.000000e+00 : f32
    %549 = vector.broadcast %cst_315 : f32 to vector<8x128xf32>
    %550 = arith.subf %549, %5 : vector<8x128xf32>
    %cst_316 = arith.constant -5.000000e+00 : f32
    %551 = vector.broadcast %cst_316 : f32 to vector<8x128xf32>
    %552 = arith.addf %551, %5 : vector<8x128xf32>
    %553 = arith.minimumf %550, %552 : vector<8x128xf32>
    %cst_317 = arith.constant 0.000000e+00 : f32
    %554 = vector.broadcast %cst_317 : f32 to vector<8x128xf32>
    %555 = arith.maximumf %553, %554 : vector<8x128xf32>
    %556 = arith.mulf %555, %6 : vector<8x128xf32>
    %cst_318 = arith.constant 7.000000e+00 : f32
    %557 = vector.broadcast %cst_318 : f32 to vector<8x128xf32>
    %558 = arith.subf %557, %9 : vector<8x128xf32>
    %cst_319 = arith.constant -5.000000e+00 : f32
    %559 = vector.broadcast %cst_319 : f32 to vector<8x128xf32>
    %560 = arith.addf %559, %9 : vector<8x128xf32>
    %561 = arith.minimumf %558, %560 : vector<8x128xf32>
    %cst_320 = arith.constant 0.000000e+00 : f32
    %562 = vector.broadcast %cst_320 : f32 to vector<8x128xf32>
    %563 = arith.maximumf %561, %562 : vector<8x128xf32>
    %564 = arith.mulf %563, %10 : vector<8x128xf32>
    %565 = arith.addf %555, %563 : vector<8x128xf32>
    %566 = arith.addf %556, %564 : vector<8x128xf32>
    %c18 = arith.constant 18 : index
    %c0_321 = arith.constant 0 : index
    %c0_322 = arith.constant 0 : index
    %567 = vector.load %arg5[%c18, %c0_321, %c0_322] : memref<25x8x128xf32, #tpu.memory_space<vmem>>, vector<1x8x128xf32>
    %568 = vector.shape_cast %567 : vector<1x8x128xf32> to vector<8x128xf32>
    %569 = arith.addf %568, %565 : vector<8x128xf32>
    %c18_323 = arith.constant 18 : index
    %c0_324 = arith.constant 0 : index
    %c0_325 = arith.constant 0 : index
    %570 = vector.load %arg5[%c18_323, %c0_324, %c0_325] : memref<25x8x128xf32, #tpu.memory_space<vmem>>, vector<1x8x128xf32>
    %571 = vector.shape_cast %570 : vector<1x8x128xf32> to vector<8x128xf32>
    %572 = vector.shape_cast %569 : vector<8x128xf32> to vector<1x8x128xf32>
    tpu.vector_store %arg5[%c18_323, %c0_324, %c0_325], %572 {strides = array<i32>} : memref<25x8x128xf32, #tpu.memory_space<vmem>>, vector<1x8x128xf32>,
    %c18_326 = arith.constant 18 : index
    %c0_327 = arith.constant 0 : index
    %c0_328 = arith.constant 0 : index
    %573 = vector.load %arg6[%c18_326, %c0_327, %c0_328] : memref<25x8x128xf32, #tpu.memory_space<vmem>>, vector<1x8x128xf32>
    %574 = vector.shape_cast %573 : vector<1x8x128xf32> to vector<8x128xf32>
    %575 = arith.addf %574, %566 : vector<8x128xf32>
    %c18_329 = arith.constant 18 : index
    %c0_330 = arith.constant 0 : index
    %c0_331 = arith.constant 0 : index
    %576 = vector.load %arg6[%c18_329, %c0_330, %c0_331] : memref<25x8x128xf32, #tpu.memory_space<vmem>>, vector<1x8x128xf32>
    %577 = vector.shape_cast %576 : vector<1x8x128xf32> to vector<8x128xf32>
    %578 = vector.shape_cast %575 : vector<8x128xf32> to vector<1x8x128xf32>
    tpu.vector_store %arg6[%c18_329, %c0_330, %c0_331], %578 {strides = array<i32>} : memref<25x8x128xf32, #tpu.memory_space<vmem>>, vector<1x8x128xf32>,
    %cst_332 = arith.constant 6.000000e+00 : f32
    %579 = vector.broadcast %cst_332 : f32 to vector<8x128xf32>
    %580 = arith.subf %579, %5 : vector<8x128xf32>
    %cst_333 = arith.constant -4.000000e+00 : f32
    %581 = vector.broadcast %cst_333 : f32 to vector<8x128xf32>
    %582 = arith.addf %581, %5 : vector<8x128xf32>
    %583 = arith.minimumf %580, %582 : vector<8x128xf32>
    %cst_334 = arith.constant 0.000000e+00 : f32
    %584 = vector.broadcast %cst_334 : f32 to vector<8x128xf32>
    %585 = arith.maximumf %583, %584 : vector<8x128xf32>
    %586 = arith.mulf %585, %6 : vector<8x128xf32>
    %cst_335 = arith.constant 6.000000e+00 : f32
    %587 = vector.broadcast %cst_335 : f32 to vector<8x128xf32>
    %588 = arith.subf %587, %9 : vector<8x128xf32>
    %cst_336 = arith.constant -4.000000e+00 : f32
    %589 = vector.broadcast %cst_336 : f32 to vector<8x128xf32>
    %590 = arith.addf %589, %9 : vector<8x128xf32>
    %591 = arith.minimumf %588, %590 : vector<8x128xf32>
    %cst_337 = arith.constant 0.000000e+00 : f32
    %592 = vector.broadcast %cst_337 : f32 to vector<8x128xf32>
    %593 = arith.maximumf %591, %592 : vector<8x128xf32>
    %594 = arith.mulf %593, %10 : vector<8x128xf32>
    %595 = arith.addf %585, %593 : vector<8x128xf32>
    %596 = arith.addf %586, %594 : vector<8x128xf32>
    %c19 = arith.constant 19 : index
    %c0_338 = arith.constant 0 : index
    %c0_339 = arith.constant 0 : index
    %597 = vector.load %arg5[%c19, %c0_338, %c0_339] : memref<25x8x128xf32, #tpu.memory_space<vmem>>, vector<1x8x128xf32>
    %598 = vector.shape_cast %597 : vector<1x8x128xf32> to vector<8x128xf32>
    %599 = arith.addf %598, %595 : vector<8x128xf32>
    %c19_340 = arith.constant 19 : index
    %c0_341 = arith.constant 0 : index
    %c0_342 = arith.constant 0 : index
    %600 = vector.load %arg5[%c19_340, %c0_341, %c0_342] : memref<25x8x128xf32, #tpu.memory_space<vmem>>, vector<1x8x128xf32>
    %601 = vector.shape_cast %600 : vector<1x8x128xf32> to vector<8x128xf32>
    %602 = vector.shape_cast %599 : vector<8x128xf32> to vector<1x8x128xf32>
    tpu.vector_store %arg5[%c19_340, %c0_341, %c0_342], %602 {strides = array<i32>} : memref<25x8x128xf32, #tpu.memory_space<vmem>>, vector<1x8x128xf32>,
    %c19_343 = arith.constant 19 : index
    %c0_344 = arith.constant 0 : index
    %c0_345 = arith.constant 0 : index
    %603 = vector.load %arg6[%c19_343, %c0_344, %c0_345] : memref<25x8x128xf32, #tpu.memory_space<vmem>>, vector<1x8x128xf32>
    %604 = vector.shape_cast %603 : vector<1x8x128xf32> to vector<8x128xf32>
    %605 = arith.addf %604, %596 : vector<8x128xf32>
    %c19_346 = arith.constant 19 : index
    %c0_347 = arith.constant 0 : index
    %c0_348 = arith.constant 0 : index
    %606 = vector.load %arg6[%c19_346, %c0_347, %c0_348] : memref<25x8x128xf32, #tpu.memory_space<vmem>>, vector<1x8x128xf32>
    %607 = vector.shape_cast %606 : vector<1x8x128xf32> to vector<8x128xf32>
    %608 = vector.shape_cast %605 : vector<8x128xf32> to vector<1x8x128xf32>
    tpu.vector_store %arg6[%c19_346, %c0_347, %c0_348], %608 {strides = array<i32>} : memref<25x8x128xf32, #tpu.memory_space<vmem>>, vector<1x8x128xf32>,
    %cst_349 = arith.constant 5.000000e+00 : f32
    %609 = vector.broadcast %cst_349 : f32 to vector<8x128xf32>
    %610 = arith.subf %609, %5 : vector<8x128xf32>
    %cst_350 = arith.constant -3.000000e+00 : f32
    %611 = vector.broadcast %cst_350 : f32 to vector<8x128xf32>
    %612 = arith.addf %611, %5 : vector<8x128xf32>
    %613 = arith.minimumf %610, %612 : vector<8x128xf32>
    %cst_351 = arith.constant 0.000000e+00 : f32
    %614 = vector.broadcast %cst_351 : f32 to vector<8x128xf32>
    %615 = arith.maximumf %613, %614 : vector<8x128xf32>
    %616 = arith.mulf %615, %6 : vector<8x128xf32>
    %cst_352 = arith.constant 5.000000e+00 : f32
    %617 = vector.broadcast %cst_352 : f32 to vector<8x128xf32>
    %618 = arith.subf %617, %9 : vector<8x128xf32>
    %cst_353 = arith.constant -3.000000e+00 : f32
    %619 = vector.broadcast %cst_353 : f32 to vector<8x128xf32>
    %620 = arith.addf %619, %9 : vector<8x128xf32>
    %621 = arith.minimumf %618, %620 : vector<8x128xf32>
    %cst_354 = arith.constant 0.000000e+00 : f32
    %622 = vector.broadcast %cst_354 : f32 to vector<8x128xf32>
    %623 = arith.maximumf %621, %622 : vector<8x128xf32>
    %624 = arith.mulf %623, %10 : vector<8x128xf32>
    %625 = arith.addf %615, %623 : vector<8x128xf32>
    %626 = arith.addf %616, %624 : vector<8x128xf32>
    %c20 = arith.constant 20 : index
    %c0_355 = arith.constant 0 : index
    %c0_356 = arith.constant 0 : index
    %627 = vector.load %arg5[%c20, %c0_355, %c0_356] : memref<25x8x128xf32, #tpu.memory_space<vmem>>, vector<1x8x128xf32>
    %628 = vector.shape_cast %627 : vector<1x8x128xf32> to vector<8x128xf32>
    %629 = arith.addf %628, %625 : vector<8x128xf32>
    %c20_357 = arith.constant 20 : index
    %c0_358 = arith.constant 0 : index
    %c0_359 = arith.constant 0 : index
    %630 = vector.load %arg5[%c20_357, %c0_358, %c0_359] : memref<25x8x128xf32, #tpu.memory_space<vmem>>, vector<1x8x128xf32>
    %631 = vector.shape_cast %630 : vector<1x8x128xf32> to vector<8x128xf32>
    %632 = vector.shape_cast %629 : vector<8x128xf32> to vector<1x8x128xf32>
    tpu.vector_store %arg5[%c20_357, %c0_358, %c0_359], %632 {strides = array<i32>} : memref<25x8x128xf32, #tpu.memory_space<vmem>>, vector<1x8x128xf32>,
    %c20_360 = arith.constant 20 : index
    %c0_361 = arith.constant 0 : index
    %c0_362 = arith.constant 0 : index
    %633 = vector.load %arg6[%c20_360, %c0_361, %c0_362] : memref<25x8x128xf32, #tpu.memory_space<vmem>>, vector<1x8x128xf32>
    %634 = vector.shape_cast %633 : vector<1x8x128xf32> to vector<8x128xf32>
    %635 = arith.addf %634, %626 : vector<8x128xf32>
    %c20_363 = arith.constant 20 : index
    %c0_364 = arith.constant 0 : index
    %c0_365 = arith.constant 0 : index
    %636 = vector.load %arg6[%c20_363, %c0_364, %c0_365] : memref<25x8x128xf32, #tpu.memory_space<vmem>>, vector<1x8x128xf32>
    %637 = vector.shape_cast %636 : vector<1x8x128xf32> to vector<8x128xf32>
    %638 = vector.shape_cast %635 : vector<8x128xf32> to vector<1x8x128xf32>
    tpu.vector_store %arg6[%c20_363, %c0_364, %c0_365], %638 {strides = array<i32>} : memref<25x8x128xf32, #tpu.memory_space<vmem>>, vector<1x8x128xf32>,
    %cst_366 = arith.constant 4.000000e+00 : f32
    %639 = vector.broadcast %cst_366 : f32 to vector<8x128xf32>
    %640 = arith.subf %639, %5 : vector<8x128xf32>
    %cst_367 = arith.constant -2.000000e+00 : f32
    %641 = vector.broadcast %cst_367 : f32 to vector<8x128xf32>
    %642 = arith.addf %641, %5 : vector<8x128xf32>
    %643 = arith.minimumf %640, %642 : vector<8x128xf32>
    %cst_368 = arith.constant 0.000000e+00 : f32
    %644 = vector.broadcast %cst_368 : f32 to vector<8x128xf32>
    %645 = arith.maximumf %643, %644 : vector<8x128xf32>
    %646 = arith.mulf %645, %6 : vector<8x128xf32>
    %cst_369 = arith.constant 4.000000e+00 : f32
    %647 = vector.broadcast %cst_369 : f32 to vector<8x128xf32>
    %648 = arith.subf %647, %9 : vector<8x128xf32>
    %cst_370 = arith.constant -2.000000e+00 : f32
    %649 = vector.broadcast %cst_370 : f32 to vector<8x128xf32>
    %650 = arith.addf %649, %9 : vector<8x128xf32>
    %651 = arith.minimumf %648, %650 : vector<8x128xf32>
    %cst_371 = arith.constant 0.000000e+00 : f32
    %652 = vector.broadcast %cst_371 : f32 to vector<8x128xf32>
    %653 = arith.maximumf %651, %652 : vector<8x128xf32>
    %654 = arith.mulf %653, %10 : vector<8x128xf32>
    %655 = arith.addf %645, %653 : vector<8x128xf32>
    %656 = arith.addf %646, %654 : vector<8x128xf32>
    %c21 = arith.constant 21 : index
    %c0_372 = arith.constant 0 : index
    %c0_373 = arith.constant 0 : index
    %657 = vector.load %arg5[%c21, %c0_372, %c0_373] : memref<25x8x128xf32, #tpu.memory_space<vmem>>, vector<1x8x128xf32>
    %658 = vector.shape_cast %657 : vector<1x8x128xf32> to vector<8x128xf32>
    %659 = arith.addf %658, %655 : vector<8x128xf32>
    %c21_374 = arith.constant 21 : index
    %c0_375 = arith.constant 0 : index
    %c0_376 = arith.constant 0 : index
    %660 = vector.load %arg5[%c21_374, %c0_375, %c0_376] : memref<25x8x128xf32, #tpu.memory_space<vmem>>, vector<1x8x128xf32>
    %661 = vector.shape_cast %660 : vector<1x8x128xf32> to vector<8x128xf32>
    %662 = vector.shape_cast %659 : vector<8x128xf32> to vector<1x8x128xf32>
    tpu.vector_store %arg5[%c21_374, %c0_375, %c0_376], %662 {strides = array<i32>} : memref<25x8x128xf32, #tpu.memory_space<vmem>>, vector<1x8x128xf32>,
    %c21_377 = arith.constant 21 : index
    %c0_378 = arith.constant 0 : index
    %c0_379 = arith.constant 0 : index
    %663 = vector.load %arg6[%c21_377, %c0_378, %c0_379] : memref<25x8x128xf32, #tpu.memory_space<vmem>>, vector<1x8x128xf32>
    %664 = vector.shape_cast %663 : vector<1x8x128xf32> to vector<8x128xf32>
    %665 = arith.addf %664, %656 : vector<8x128xf32>
    %c21_380 = arith.constant 21 : index
    %c0_381 = arith.constant 0 : index
    %c0_382 = arith.constant 0 : index
    %666 = vector.load %arg6[%c21_380, %c0_381, %c0_382] : memref<25x8x128xf32, #tpu.memory_space<vmem>>, vector<1x8x128xf32>
    %667 = vector.shape_cast %666 : vector<1x8x128xf32> to vector<8x128xf32>
    %668 = vector.shape_cast %665 : vector<8x128xf32> to vector<1x8x128xf32>
    tpu.vector_store %arg6[%c21_380, %c0_381, %c0_382], %668 {strides = array<i32>} : memref<25x8x128xf32, #tpu.memory_space<vmem>>, vector<1x8x128xf32>,
    %cst_383 = arith.constant 3.000000e+00 : f32
    %669 = vector.broadcast %cst_383 : f32 to vector<8x128xf32>
    %670 = arith.subf %669, %5 : vector<8x128xf32>
    %cst_384 = arith.constant -1.000000e+00 : f32
    %671 = vector.broadcast %cst_384 : f32 to vector<8x128xf32>
    %672 = arith.addf %671, %5 : vector<8x128xf32>
    %673 = arith.minimumf %670, %672 : vector<8x128xf32>
    %cst_385 = arith.constant 0.000000e+00 : f32
    %674 = vector.broadcast %cst_385 : f32 to vector<8x128xf32>
    %675 = arith.maximumf %673, %674 : vector<8x128xf32>
    %676 = arith.mulf %675, %6 : vector<8x128xf32>
    %cst_386 = arith.constant 3.000000e+00 : f32
    %677 = vector.broadcast %cst_386 : f32 to vector<8x128xf32>
    %678 = arith.subf %677, %9 : vector<8x128xf32>
    %cst_387 = arith.constant -1.000000e+00 : f32
    %679 = vector.broadcast %cst_387 : f32 to vector<8x128xf32>
    %680 = arith.addf %679, %9 : vector<8x128xf32>
    %681 = arith.minimumf %678, %680 : vector<8x128xf32>
    %cst_388 = arith.constant 0.000000e+00 : f32
    %682 = vector.broadcast %cst_388 : f32 to vector<8x128xf32>
    %683 = arith.maximumf %681, %682 : vector<8x128xf32>
    %684 = arith.mulf %683, %10 : vector<8x128xf32>
    %685 = arith.addf %675, %683 : vector<8x128xf32>
    %686 = arith.addf %676, %684 : vector<8x128xf32>
    %c22 = arith.constant 22 : index
    %c0_389 = arith.constant 0 : index
    %c0_390 = arith.constant 0 : index
    %687 = vector.load %arg5[%c22, %c0_389, %c0_390] : memref<25x8x128xf32, #tpu.memory_space<vmem>>, vector<1x8x128xf32>
    %688 = vector.shape_cast %687 : vector<1x8x128xf32> to vector<8x128xf32>
    %689 = arith.addf %688, %685 : vector<8x128xf32>
    %c22_391 = arith.constant 22 : index
    %c0_392 = arith.constant 0 : index
    %c0_393 = arith.constant 0 : index
    %690 = vector.load %arg5[%c22_391, %c0_392, %c0_393] : memref<25x8x128xf32, #tpu.memory_space<vmem>>, vector<1x8x128xf32>
    %691 = vector.shape_cast %690 : vector<1x8x128xf32> to vector<8x128xf32>
    %692 = vector.shape_cast %689 : vector<8x128xf32> to vector<1x8x128xf32>
    tpu.vector_store %arg5[%c22_391, %c0_392, %c0_393], %692 {strides = array<i32>} : memref<25x8x128xf32, #tpu.memory_space<vmem>>, vector<1x8x128xf32>,
    %c22_394 = arith.constant 22 : index
    %c0_395 = arith.constant 0 : index
    %c0_396 = arith.constant 0 : index
    %693 = vector.load %arg6[%c22_394, %c0_395, %c0_396] : memref<25x8x128xf32, #tpu.memory_space<vmem>>, vector<1x8x128xf32>
    %694 = vector.shape_cast %693 : vector<1x8x128xf32> to vector<8x128xf32>
    %695 = arith.addf %694, %686 : vector<8x128xf32>
    %c22_397 = arith.constant 22 : index
    %c0_398 = arith.constant 0 : index
    %c0_399 = arith.constant 0 : index
    %696 = vector.load %arg6[%c22_397, %c0_398, %c0_399] : memref<25x8x128xf32, #tpu.memory_space<vmem>>, vector<1x8x128xf32>
    %697 = vector.shape_cast %696 : vector<1x8x128xf32> to vector<8x128xf32>
    %698 = vector.shape_cast %695 : vector<8x128xf32> to vector<1x8x128xf32>
    tpu.vector_store %arg6[%c22_397, %c0_398, %c0_399], %698 {strides = array<i32>} : memref<25x8x128xf32, #tpu.memory_space<vmem>>, vector<1x8x128xf32>,
    %cst_400 = arith.constant 2.000000e+00 : f32
    %699 = vector.broadcast %cst_400 : f32 to vector<8x128xf32>
    %700 = arith.subf %699, %5 : vector<8x128xf32>
    %cst_401 = arith.constant 0.000000e+00 : f32
    %701 = vector.broadcast %cst_401 : f32 to vector<8x128xf32>
    %702 = arith.addf %701, %5 : vector<8x128xf32>
    %703 = arith.minimumf %700, %702 : vector<8x128xf32>
    %cst_402 = arith.constant 0.000000e+00 : f32
    %704 = vector.broadcast %cst_402 : f32 to vector<8x128xf32>
    %705 = arith.maximumf %703, %704 : vector<8x128xf32>
    %706 = arith.mulf %705, %6 : vector<8x128xf32>
    %cst_403 = arith.constant 2.000000e+00 : f32
    %707 = vector.broadcast %cst_403 : f32 to vector<8x128xf32>
    %708 = arith.subf %707, %9 : vector<8x128xf32>
    %cst_404 = arith.constant 0.000000e+00 : f32
    %709 = vector.broadcast %cst_404 : f32 to vector<8x128xf32>
    %710 = arith.addf %709, %9 : vector<8x128xf32>
    %711 = arith.minimumf %708, %710 : vector<8x128xf32>
    %cst_405 = arith.constant 0.000000e+00 : f32
    %712 = vector.broadcast %cst_405 : f32 to vector<8x128xf32>
    %713 = arith.maximumf %711, %712 : vector<8x128xf32>
    %714 = arith.mulf %713, %10 : vector<8x128xf32>
    %715 = arith.addf %705, %713 : vector<8x128xf32>
    %716 = arith.addf %706, %714 : vector<8x128xf32>
    %c23 = arith.constant 23 : index
    %c0_406 = arith.constant 0 : index
    %c0_407 = arith.constant 0 : index
    %717 = vector.load %arg5[%c23, %c0_406, %c0_407] : memref<25x8x128xf32, #tpu.memory_space<vmem>>, vector<1x8x128xf32>
    %718 = vector.shape_cast %717 : vector<1x8x128xf32> to vector<8x128xf32>
    %719 = arith.addf %718, %715 : vector<8x128xf32>
    %c23_408 = arith.constant 23 : index
    %c0_409 = arith.constant 0 : index
    %c0_410 = arith.constant 0 : index
    %720 = vector.load %arg5[%c23_408, %c0_409, %c0_410] : memref<25x8x128xf32, #tpu.memory_space<vmem>>, vector<1x8x128xf32>
    %721 = vector.shape_cast %720 : vector<1x8x128xf32> to vector<8x128xf32>
    %722 = vector.shape_cast %719 : vector<8x128xf32> to vector<1x8x128xf32>
    tpu.vector_store %arg5[%c23_408, %c0_409, %c0_410], %722 {strides = array<i32>} : memref<25x8x128xf32, #tpu.memory_space<vmem>>, vector<1x8x128xf32>,
    %c23_411 = arith.constant 23 : index
    %c0_412 = arith.constant 0 : index
    %c0_413 = arith.constant 0 : index
    %723 = vector.load %arg6[%c23_411, %c0_412, %c0_413] : memref<25x8x128xf32, #tpu.memory_space<vmem>>, vector<1x8x128xf32>
    %724 = vector.shape_cast %723 : vector<1x8x128xf32> to vector<8x128xf32>
    %725 = arith.addf %724, %716 : vector<8x128xf32>
    %c23_414 = arith.constant 23 : index
    %c0_415 = arith.constant 0 : index
    %c0_416 = arith.constant 0 : index
    %726 = vector.load %arg6[%c23_414, %c0_415, %c0_416] : memref<25x8x128xf32, #tpu.memory_space<vmem>>, vector<1x8x128xf32>
    %727 = vector.shape_cast %726 : vector<1x8x128xf32> to vector<8x128xf32>
    %728 = vector.shape_cast %725 : vector<8x128xf32> to vector<1x8x128xf32>
    tpu.vector_store %arg6[%c23_414, %c0_415, %c0_416], %728 {strides = array<i32>} : memref<25x8x128xf32, #tpu.memory_space<vmem>>, vector<1x8x128xf32>,
    %cst_417 = arith.constant 1.000000e+00 : f32
    %729 = vector.broadcast %cst_417 : f32 to vector<8x128xf32>
    %730 = arith.subf %729, %5 : vector<8x128xf32>
    %cst_418 = arith.constant 1.000000e+00 : f32
    %731 = vector.broadcast %cst_418 : f32 to vector<8x128xf32>
    %732 = arith.minimumf %730, %731 : vector<8x128xf32>
    %cst_419 = arith.constant 0.000000e+00 : f32
    %733 = vector.broadcast %cst_419 : f32 to vector<8x128xf32>
    %734 = arith.maximumf %732, %733 : vector<8x128xf32>
    %735 = arith.mulf %734, %6 : vector<8x128xf32>
    %cst_420 = arith.constant 1.000000e+00 : f32
    %736 = vector.broadcast %cst_420 : f32 to vector<8x128xf32>
    %737 = arith.subf %736, %9 : vector<8x128xf32>
    %cst_421 = arith.constant 1.000000e+00 : f32
    %738 = vector.broadcast %cst_421 : f32 to vector<8x128xf32>
    %739 = arith.minimumf %737, %738 : vector<8x128xf32>
    %cst_422 = arith.constant 0.000000e+00 : f32
    %740 = vector.broadcast %cst_422 : f32 to vector<8x128xf32>
    %741 = arith.maximumf %739, %740 : vector<8x128xf32>
    %742 = arith.mulf %741, %10 : vector<8x128xf32>
    %743 = arith.addf %734, %741 : vector<8x128xf32>
    %744 = arith.addf %735, %742 : vector<8x128xf32>
    %c24 = arith.constant 24 : index
    %c0_423 = arith.constant 0 : index
    %c0_424 = arith.constant 0 : index
    %745 = vector.load %arg5[%c24, %c0_423, %c0_424] : memref<25x8x128xf32, #tpu.memory_space<vmem>>, vector<1x8x128xf32>
    %746 = vector.shape_cast %745 : vector<1x8x128xf32> to vector<8x128xf32>
    %747 = arith.addf %746, %743 : vector<8x128xf32>
    %c24_425 = arith.constant 24 : index
    %c0_426 = arith.constant 0 : index
    %c0_427 = arith.constant 0 : index
    %748 = vector.load %arg5[%c24_425, %c0_426, %c0_427] : memref<25x8x128xf32, #tpu.memory_space<vmem>>, vector<1x8x128xf32>
    %749 = vector.shape_cast %748 : vector<1x8x128xf32> to vector<8x128xf32>
    %750 = vector.shape_cast %747 : vector<8x128xf32> to vector<1x8x128xf32>
    tpu.vector_store %arg5[%c24_425, %c0_426, %c0_427], %750 {strides = array<i32>} : memref<25x8x128xf32, #tpu.memory_space<vmem>>, vector<1x8x128xf32>,
    %c24_428 = arith.constant 24 : index
    %c0_429 = arith.constant 0 : index
    %c0_430 = arith.constant 0 : index
    %751 = vector.load %arg6[%c24_428, %c0_429, %c0_430] : memref<25x8x128xf32, #tpu.memory_space<vmem>>, vector<1x8x128xf32>
    %752 = vector.shape_cast %751 : vector<1x8x128xf32> to vector<8x128xf32>
    %753 = arith.addf %752, %744 : vector<8x128xf32>
    %c24_431 = arith.constant 24 : index
    %c0_432 = arith.constant 0 : index
    %c0_433 = arith.constant 0 : index
    %754 = vector.load %arg6[%c24_431, %c0_432, %c0_433] : memref<25x8x128xf32, #tpu.memory_space<vmem>>, vector<1x8x128xf32>
    %755 = vector.shape_cast %754 : vector<1x8x128xf32> to vector<8x128xf32>
    %756 = vector.shape_cast %753 : vector<8x128xf32> to vector<1x8x128xf32>
    tpu.vector_store %arg6[%c24_431, %c0_432, %c0_433], %756 {strides = array<i32>} : memref<25x8x128xf32, #tpu.memory_space<vmem>>, vector<1x8x128xf32>,
    %c0_i32_434 = arith.constant 0 : i32
    %757 = arith.cmpi eq, %arg1, %c0_i32_434 : i32
    %758 = arith.extui %757 : i1 to i32
    %c0_i32_435 = arith.constant 0 : i32
    %759 = arith.cmpi ne, %758, %c0_i32_435 : i32
    scf.if %759 {
      %c0_436 = arith.constant 0 : index
      %c0_437 = arith.constant 0 : index
      %c0_438 = arith.constant 0 : index
      %760 = vector.load %arg5[%c0_436, %c0_437, %c0_438] : memref<25x8x128xf32, #tpu.memory_space<vmem>>, vector<25x8x128xf32>
      %cst_439 = arith.constant dense<0.000000e+00> : vector<25x8xf32>
      %761 = vector.multi_reduction <add>, %760, %cst_439 [2] : vector<25x8x128xf32> to vector<25x8xf32>
      %762 = tpu.transpose %761, [1, 0] : vector<25x8xf32> -> vector<8x25xf32>
      %c0_440 = arith.constant 0 : index
      %c0_441 = arith.constant 0 : index
      %c0_442 = arith.constant 0 : index
      %763 = vector.load %arg6[%c0_440, %c0_441, %c0_442] : memref<25x8x128xf32, #tpu.memory_space<vmem>>, vector<25x8x128xf32>
      %cst_443 = arith.constant dense<0.000000e+00> : vector<25x8xf32>
      %764 = vector.multi_reduction <add>, %763, %cst_443 [2] : vector<25x8x128xf32> to vector<25x8xf32>
      %765 = tpu.transpose %764, [1, 0] : vector<25x8xf32> -> vector<8x25xf32>
      %766 = tpu.iota {dimensions = array<i32: 0>} : vector<25x25xi32>
      %767 = tpu.iota {dimensions = array<i32: 1>} : vector<25x25xi32>
      %768 = arith.cmpi sle, %766, %767 : vector<25x25xi32>
      %769 = arith.extui %768 : vector<25x25xi1> to vector<25x25xi32>
      %770 = arith.sitofp %769 : vector<25x25xi32> to vector<25x25xf32>
      %cst_444 = arith.constant dense<0.000000e+00> : vector<8x25xf32>
      %771 = tpu.matmul %765, %770, %cst_444 {dimension_numbers = #tpu.dot_dimension_numbers<[1], [0], [0], [1], [0, 0, 1, 1], [], []>} : vector<8x25xf32>, vector<25x25xf32>, vector<8x25xf32> -> vector<8x25xf32>
      %cst_445 = arith.constant dense<0.000000e+00> : vector<8x25xf32>
      %772 = tpu.matmul %762, %770, %cst_445 {dimension_numbers = #tpu.dot_dimension_numbers<[1], [0], [0], [1], [0, 0, 1, 1], [], []>} : vector<8x25xf32>, vector<25x25xf32>, vector<8x25xf32> -> vector<8x25xf32>
      %cst_446 = arith.constant 1.000000e-16 : f32
      %773 = vector.broadcast %cst_446 : f32 to vector<8x25xf32>
      %774 = arith.addf %773, %772 : vector<8x25xf32>
      %775 = arith.divf %771, %774 : vector<8x25xf32>
      %cst_447 = arith.constant dense<0.000000e+00> : vector<8xf32>
      %776 = vector.multi_reduction <add>, %765, %cst_447 [1] : vector<8x25xf32> to vector<8xf32>
      %777 = vector.shape_cast %776 : vector<8xf32> to vector<8x1xf32>
      %cst_448 = arith.constant 1.000000e-16 : f32
      %778 = vector.broadcast %cst_448 : f32 to vector<8x1xf32>
      %779 = arith.addf %778, %777 : vector<8x1xf32>
      %780 = vector.broadcast %779 : vector<8x1xf32> to vector<8x25xf32>
      %781 = arith.divf %765, %780 : vector<8x25xf32>
      %782 = arith.mulf %775, %781 : vector<8x25xf32>
      %cst_449 = arith.constant dense<0.000000e+00> : vector<8xf32>
      %783 = vector.multi_reduction <add>, %782, %cst_449 [1] : vector<8x25xf32> to vector<8xf32>
      %784 = vector.shape_cast %783 : vector<8xf32> to vector<8x1xf32>
      %c0_450 = arith.constant 0 : index
      %c0_451 = arith.constant 0 : index
      %785 = vector.load %arg4[%c0_450, %c0_451] : memref<8x1xf32, #tpu.memory_space<vmem>>, vector<8x1xf32>
      tpu.vector_store %arg4[%c0_450, %c0_451], %784 {strides = array<i32>} : memref<8x1xf32, #tpu.memory_space<vmem>>, vector<8x1xf32>,
    } else {
    }
    return
  }
  func.func @transform_0(%arg0: i32, %arg1: i32) -> (i32, i32) {
    %c0_i32 = arith.constant 0 : i32
    return %arg0, %arg1 : i32, i32
  }
  func.func @transform_1(%arg0: i32, %arg1: i32) -> (i32, i32) {
    %c0_i32 = arith.constant 0 : i32
    return %arg0, %arg1 : i32, i32
  }
  func.func @transform_2(%arg0: i32, %arg1: i32) -> (i32, i32) {
    %c0_i32 = arith.constant 0 : i32
    %c0_i32_0 = arith.constant 0 : i32
    return %arg0, %c0_i32 : i32, i32
  }
}

</mosaic_0001>

<llo_original>
// kernel: tpu_custom_call.1
$region0: #{tpu_custom_call.1}
  #allocation0 [shape = 'u32[]', space=smem, size = 0x4, offset = 0x4, fixed_abs, tag = 'smem constant byte address 0x4 - core index']
  #allocation1 [shape = 'u32[144,128]{1,0:T(1,128)}', space=vmem, size = 0x12000, scoped, tag = 'internal scratch']
  #allocation2 [shape = 'f32[25,8,128]{2,1,0:T(8,128)}', space=vmem, size = 0x19000, scoped, tag = 'scratch operand']
  #allocation3 [shape = 'f32[25,8,128]{2,1,0:T(8,128)}', space=vmem, size = 0x19000, scoped, tag = 'scratch operand']
  %s0 = inlined_call_operand.hbm [shape: f32[8,256], index: 0, kind: input, shape index: {}]
  %s1 = inlined_call_operand.hbm [shape: f32[8,256], index: 1, kind: input, shape index: {}]
  %s2 = inlined_call_operand.vmem [shape: f32[8,1], index: 2, kind: output, shape index: {}]
  %s3 = sld [smem:[#allocation0]]
  $region34: #{tpu_custom_call.1} parent=0
    _
  %s5 = ssub.s32 1, %s3
  %s6 = scalar_select 0, %s5, %s3
  $region1: #{tpu_custom_call.1} parent=0
    #allocation4 [shape = 'u8[8192]{0}', space=vmem, size = 0x2000, scoped, tag = 'input window, operand 0, single buffered']
    #allocation5 [shape = 's32[1]{0}', space=sflag, size = 0x4, scoped, tag = 'scoped memory for tpu_custom_call.1']
    #allocation6 [shape = 'u8[8192]{0}', space=vmem, size = 0x2000, scoped, tag = 'input window, operand 1, single buffered']
    #allocation7 [shape = 's32[1]{0}', space=sflag, size = 0x4, scoped, tag = 'scoped memory for tpu_custom_call.1']
    %7 = vsyncpa [#allocation5], 0
    %8 = vsyncpa [#allocation7], 0
    // Predicated region
    $region2: #{tpu_custom_call.1} parent=1 // pred_check
      _
    $region3: #{tpu_custom_call.1} parent=1 // pred_check_branch
      %10 = sbr.rel (0) target = $region5
    $region4: #{tpu_custom_call.1} parent=1 // pred_region
      %s12 = ssub.s32 256, 256
      %13 = vsyncadd [#allocation5], %s12
      %s15 = sshll.u32 [#allocation4], 4
      %s16 = int_to_ptr.vmem [resolvable:$true] %s15
      %18 = dma.hbm_to_vmem [thread:$0]  %s0, 256, %s16, [#allocation5]
    $region5: #{tpu_custom_call.1} parent=1 // pred_fallthru
      _
    // Predicated region
    $region6: #{tpu_custom_call.1} parent=1 // pred_check
      _
    $region7: #{tpu_custom_call.1} parent=1 // pred_check_branch
      %20 = sbr.rel (0) target = $region9
    $region8: #{tpu_custom_call.1} parent=1 // pred_region
      %s22 = ssub.s32 256, 256
      %23 = vsyncadd [#allocation7], %s22
      %s25 = sshll.u32 [#allocation6], 4
      %s26 = int_to_ptr.vmem [resolvable:$true] %s25
      %28 = dma.hbm_to_vmem [thread:$0]  %s1, 256, %s26, [#allocation7]
    $region9: #{tpu_custom_call.1} parent=1 // pred_fallthru
      _
    // Predicated region
    $region10: #{tpu_custom_call.1} parent=1 // pred_check
      _
    $region11: #{tpu_custom_call.1} parent=1 // pred_check_branch
      %30 = sbr.rel (0) target = $region13
    $region12: #{tpu_custom_call.1} parent=1 // pred_region
      %31 = dma.done [#allocation5], 256
    $region13: #{tpu_custom_call.1} parent=1 // pred_fallthru
      _
    // Predicated region
    $region14: #{tpu_custom_call.1} parent=1 // pred_check
      _
    $region15: #{tpu_custom_call.1} parent=1 // pred_check_branch
      %33 = sbr.rel (0) target = $region17
    $region16: #{tpu_custom_call.1} parent=1 // pred_region
      %34 = dma.done [#allocation7], 256
    $region17: #{tpu_custom_call.1} parent=1 // pred_fallthru
      _
    %p35 = scmp.eq.s32.totalorder 0, 0
    // Predicated region
    $region18: #{tpu_custom_call.1} parent=1 // pred_check
      %p36 = pneg %p35
    $region19: #{tpu_custom_call.1} parent=1 // pred_check_branch
      %38 = sbr.rel (%p36) target = $region21
    $region20: #{tpu_custom_call.1} parent=1 // pred_region
      %39 = vst [vmem:[#allocation2] sm:$0xff] 0.0
      %40 = vst [vmem:[#allocation2 + $0x8] sm:$0xff] 0.0
      %41 = vst [vmem:[#allocation2 + $0x10] sm:$0xff] 0.0
      %42 = vst [vmem:[#allocation2 + $0x18] sm:$0xff] 0.0
      %43 = vst [vmem:[#allocation2 + $0x20] sm:$0xff] 0.0
      %44 = vst [vmem:[#allocation2 + $0x28] sm:$0xff] 0.0
      %45 = vst [vmem:[#allocation2 + $0x30] sm:$0xff] 0.0
      %46 = vst [vmem:[#allocation2 + $0x38] sm:$0xff] 0.0
      %47 = vst [vmem:[#allocation2 + $0x40] sm:$0xff] 0.0
      %48 = vst [vmem:[#allocation2 + $0x48] sm:$0xff] 0.0
      %49 = vst [vmem:[#allocation2 + $0x50] sm:$0xff] 0.0
      %50 = vst [vmem:[#allocation2 + $0x58] sm:$0xff] 0.0
      %51 = vst [vmem:[#allocation2 + $0x60] sm:$0xff] 0.0
      %52 = vst [vmem:[#allocation2 + $0x68] sm:$0xff] 0.0
      %53 = vst [vmem:[#allocation2 + $0x70] sm:$0xff] 0.0
      %54 = vst [vmem:[#allocation2 + $0x78] sm:$0xff] 0.0
      %55 = vst [vmem:[#allocation2 + $0x80] sm:$0xff] 0.0
      %56 = vst [vmem:[#allocation2 + $0x88] sm:$0xff] 0.0
      %57 = vst [vmem:[#allocation2 + $0x90] sm:$0xff] 0.0
      %58 = vst [vmem:[#allocation2 + $0x98] sm:$0xff] 0.0
      %59 = vst [vmem:[#allocation2 + $0xa0] sm:$0xff] 0.0
      %60 = vst [vmem:[#allocation2 + $0xa8] sm:$0xff] 0.0
      %61 = vst [vmem:[#allocation2 + $0xb0] sm:$0xff] 0.0
      %62 = vst [vmem:[#allocation2 + $0xb8] sm:$0xff] 0.0
      %63 = vst [vmem:[#allocation2 + $0xc0] sm:$0xff] 0.0
      %64 = vst [vmem:[#allocation3] sm:$0xff] 0.0
      %65 = vst [vmem:[#allocation3 + $0x8] sm:$0xff] 0.0
      %66 = vst [vmem:[#allocation3 + $0x10] sm:$0xff] 0.0
      %67 = vst [vmem:[#allocation3 + $0x18] sm:$0xff] 0.0
      %68 = vst [vmem:[#allocation3 + $0x20] sm:$0xff] 0.0
      %69 = vst [vmem:[#allocation3 + $0x28] sm:$0xff] 0.0
      %70 = vst [vmem:[#allocation3 + $0x30] sm:$0xff] 0.0
      %71 = vst [vmem:[#allocation3 + $0x38] sm:$0xff] 0.0
      %72 = vst [vmem:[#allocation3 + $0x40] sm:$0xff] 0.0
      %73 = vst [vmem:[#allocation3 + $0x48] sm:$0xff] 0.0
      %74 = vst [vmem:[#allocation3 + $0x50] sm:$0xff] 0.0
      %75 = vst [vmem:[#allocation3 + $0x58] sm:$0xff] 0.0
      %76 = vst [vmem:[#allocation3 + $0x60] sm:$0xff] 0.0
      %77 = vst [vmem:[#allocation3 + $0x68] sm:$0xff] 0.0
      %78 = vst [vmem:[#allocation3 + $0x70] sm:$0xff] 0.0
      %79 = vst [vmem:[#allocation3 + $0x78] sm:$0xff] 0.0
      %80 = vst [vmem:[#allocation3 + $0x80] sm:$0xff] 0.0
      %81 = vst [vmem:[#allocation3 + $0x88] sm:$0xff] 0.0
      %82 = vst [vmem:[#allocation3 + $0x90] sm:$0xff] 0.0
      %83 = vst [vmem:[#allocation3 + $0x98] sm:$0xff] 0.0
      %84 = vst [vmem:[#allocation3 + $0xa0] sm:$0xff] 0.0
      %85 = vst [vmem:[#allocation3 + $0xa8] sm:$0xff] 0.0
      %86 = vst [vmem:[#allocation3 + $0xb0] sm:$0xff] 0.0
      %87 = vst [vmem:[#allocation3 + $0xb8] sm:$0xff] 0.0
      %88 = vst [vmem:[#allocation3 + $0xc0] sm:$0xff] 0.0
    $region21: #{tpu_custom_call.1} parent=1 // pred_fallthru
      _
    %v89 = vld [vmem:[#allocation4] sm:$0xff]
    %v90 = vmul.f32 %v89, 24.0
    %v91 = vld [vmem:[#allocation6] sm:$0xff]
    %v92 = vld [vmem:[#allocation4 + $0x8] sm:$0xff]
    %v93 = vmul.f32 %v92, 24.0
    %v94 = vld [vmem:[#allocation6 + $0x8] sm:$0xff]
    %v95 = vadd.f32 %v90, -23.0
    %v96 = vmin.f32 %v95, 1.0
    %v97 = vmax.f32 %v96, 0.0
    %v98 = vmul.f32 %v97, %v91
    %v99 = vadd.f32 %v93, -23.0
    %v100 = vmin.f32 %v99, 1.0
    %v101 = vmax.f32 %v100, 0.0
    %v102 = vmul.f32 %v101, %v94
    %v103 = vadd.f32 %v97, %v101
    %v104 = vadd.f32 %v98, %v102
    %v105 = vld [vmem:[#allocation2] sm:$0xff]
    %v106 = vadd.f32 %v105, %v103
    %107 = vst [vmem:[#allocation2] sm:$0xff] %v106
    %v108 = vld [vmem:[#allocation3] sm:$0xff]
    %v109 = vadd.f32 %v108, %v104
    %110 = vst [vmem:[#allocation3] sm:$0xff] %v109
    %v111 = vsub.f32 24.0, %v90
    %v112 = vadd.f32 %v90, -22.0
    %v113 = vmin.f32 %v111, %v112
    %v114 = vmax.f32 %v113, 0.0
    %v115 = vmul.f32 %v114, %v91
    %v116 = vsub.f32 24.0, %v93
    %v117 = vadd.f32 %v93, -22.0
    %v118 = vmin.f32 %v116, %v117
    %v119 = vmax.f32 %v118, 0.0
    %v120 = vmul.f32 %v119, %v94
    %v121 = vadd.f32 %v114, %v119
    %v122 = vadd.f32 %v115, %v120
    %s123 = scalar_lea.vmem [#allocation2], 8
    %v124 = vld [vmem:[%s123] sm:$0xff]
    %v125 = vadd.f32 %v124, %v121
    %126 = vst [vmem:[%s123] sm:$0xff] %v125
    %s127 = scalar_lea.vmem [#allocation3], 8
    %v128 = vld [vmem:[%s127] sm:$0xff]
    %v129 = vadd.f32 %v128, %v122
    %130 = vst [vmem:[%s127] sm:$0xff] %v129
    %v131 = vsub.f32 23.0, %v90
    %v132 = vadd.f32 %v90, -21.0
    %v133 = vmin.f32 %v131, %v132
    %v134 = vmax.f32 %v133, 0.0
    %v135 = vmul.f32 %v134, %v91
    %v136 = vsub.f32 23.0, %v93
    %v137 = vadd.f32 %v93, -21.0
    %v138 = vmin.f32 %v136, %v137
    %v139 = vmax.f32 %v138, 0.0
    %v140 = vmul.f32 %v139, %v94
    %v141 = vadd.f32 %v134, %v139
    %v142 = vadd.f32 %v135, %v140
    %s143 = scalar_lea.vmem [#allocation2], 16
    %v144 = vld [vmem:[%s143] sm:$0xff]
    %v145 = vadd.f32 %v144, %v141
    %146 = vst [vmem:[%s143] sm:$0xff] %v145
    %s147 = scalar_lea.vmem [#allocation3], 16
    %v148 = vld [vmem:[%s147] sm:$0xff]
    %v149 = vadd.f32 %v148, %v142
    %150 = vst [vmem:[%s147] sm:$0xff] %v149
    %v151 = vsub.f32 22.0, %v90
    %v152 = vadd.f32 %v90, -20.0
    %v153 = vmin.f32 %v151, %v152
    %v154 = vmax.f32 %v153, 0.0
    %v155 = vmul.f32 %v154, %v91
    %v156 = vsub.f32 22.0, %v93
    %v157 = vadd.f32 %v93, -20.0
    %v158 = vmin.f32 %v156, %v157
    %v159 = vmax.f32 %v158, 0.0
    %v160 = vmul.f32 %v159, %v94
    %v161 = vadd.f32 %v154, %v159
    %v162 = vadd.f32 %v155, %v160
    %s163 = scalar_lea.vmem [#allocation2], 24
    %v164 = vld [vmem:[%s163] sm:$0xff]
    %v165 = vadd.f32 %v164, %v161
    %166 = vst [vmem:[%s163] sm:$0xff] %v165
    %s167 = scalar_lea.vmem [#allocation3], 24
    %v168 = vld [vmem:[%s167] sm:$0xff]
    %v169 = vadd.f32 %v168, %v162
    %170 = vst [vmem:[%s167] sm:$0xff] %v169
    %v171 = vsub.f32 21.0, %v90
    %v172 = vadd.f32 %v90, -19.0
    %v173 = vmin.f32 %v171, %v172
    %v174 = vmax.f32 %v173, 0.0
    %v175 = vmul.f32 %v174, %v91
    %v176 = vsub.f32 21.0, %v93
    %v177 = vadd.f32 %v93, -19.0
    %v178 = vmin.f32 %v176, %v177
    %v179 = vmax.f32 %v178, 0.0
    %v180 = vmul.f32 %v179, %v94
    %v181 = vadd.f32 %v174, %v179
    %v182 = vadd.f32 %v175, %v180
    %s183 = scalar_lea.vmem [#allocation2], 32
    %v184 = vld [vmem:[%s183] sm:$0xff]
    %v185 = vadd.f32 %v184, %v181
    %186 = vst [vmem:[%s183] sm:$0xff] %v185
    %s187 = scalar_lea.vmem [#allocation3], 32
    %v188 = vld [vmem:[%s187] sm:$0xff]
    %v189 = vadd.f32 %v188, %v182
    %190 = vst [vmem:[%s187] sm:$0xff] %v189
    %v191 = vsub.f32 20.0, %v90
    %v192 = vadd.f32 %v90, -18.0
    %v193 = vmin.f32 %v191, %v192
    %v194 = vmax.f32 %v193, 0.0
    %v195 = vmul.f32 %v194, %v91
    %v196 = vsub.f32 20.0, %v93
    %v197 = vadd.f32 %v93, -18.0
    %v198 = vmin.f32 %v196, %v197
    %v199 = vmax.f32 %v198, 0.0
    %v200 = vmul.f32 %v199, %v94
    %v201 = vadd.f32 %v194, %v199
    %v202 = vadd.f32 %v195, %v200
    %s203 = scalar_lea.vmem [#allocation2], 40
    %v204 = vld [vmem:[%s203] sm:$0xff]
    %v205 = vadd.f32 %v204, %v201
    %206 = vst [vmem:[%s203] sm:$0xff] %v205
    %s207 = scalar_lea.vmem [#allocation3], 40
    %v208 = vld [vmem:[%s207] sm:$0xff]
    %v209 = vadd.f32 %v208, %v202
    %210 = vst [vmem:[%s207] sm:$0xff] %v209
    %v211 = vsub.f32 19.0, %v90
    %v212 = vadd.f32 %v90, -17.0
    %v213 = vmin.f32 %v211, %v212
    %v214 = vmax.f32 %v213, 0.0
    %v215 = vmul.f32 %v214, %v91
    %v216 = vsub.f32 19.0, %v93
    %v217 = vadd.f32 %v93, -17.0
    %v218 = vmin.f32 %v216, %v217
    %v219 = vmax.f32 %v218, 0.0
    %v220 = vmul.f32 %v219, %v94
    %v221 = vadd.f32 %v214, %v219
    %v222 = vadd.f32 %v215, %v220
    %s223 = scalar_lea.vmem [#allocation2], 48
    %v224 = vld [vmem:[%s223] sm:$0xff]
    %v225 = vadd.f32 %v224, %v221
    %226 = vst [vmem:[%s223] sm:$0xff] %v225
    %s227 = scalar_lea.vmem [#allocation3], 48
    %v228 = vld [vmem:[%s227] sm:$0xff]
    %v229 = vadd.f32 %v228, %v222
    %230 = vst [vmem:[%s227] sm:$0xff] %v229
    %v231 = vsub.f32 18.0, %v90
    %v232 = vadd.f32 %v90, -16.0
    %v233 = vmin.f32 %v231, %v232
    %v234 = vmax.f32 %v233, 0.0
    %v235 = vmul.f32 %v234, %v91
    %v236 = vsub.f32 18.0, %v93
    %v237 = vadd.f32 %v93, -16.0
    %v238 = vmin.f32 %v236, %v237
    %v239 = vmax.f32 %v238, 0.0
    %v240 = vmul.f32 %v239, %v94
    %v241 = vadd.f32 %v234, %v239
    %v242 = vadd.f32 %v235, %v240
    %s243 = scalar_lea.vmem [#allocation2], 56
    %v244 = vld [vmem:[%s243] sm:$0xff]
    %v245 = vadd.f32 %v244, %v241
    %246 = vst [vmem:[%s243] sm:$0xff] %v245
    %s247 = scalar_lea.vmem [#allocation3], 56
    %v248 = vld [vmem:[%s247] sm:$0xff]
    %v249 = vadd.f32 %v248, %v242
    %250 = vst [vmem:[%s247] sm:$0xff] %v249
    %v251 = vsub.f32 17.0, %v90
    %v252 = vadd.f32 %v90, -15.0
    %v253 = vmin.f32 %v251, %v252
    %v254 = vmax.f32 %v253, 0.0
    %v255 = vmul.f32 %v254, %v91
    %v256 = vsub.f32 17.0, %v93
    %v257 = vadd.f32 %v93, -15.0
    %v258 = vmin.f32 %v256, %v257
    %v259 = vmax.f32 %v258, 0.0
    %v260 = vmul.f32 %v259, %v94
    %v261 = vadd.f32 %v254, %v259
    %v262 = vadd.f32 %v255, %v260
    %s263 = scalar_lea.vmem [#allocation2], 64
    %v264 = vld [vmem:[%s263] sm:$0xff]
    %v265 = vadd.f32 %v264, %v261
    %266 = vst [vmem:[%s263] sm:$0xff] %v265
    %s267 = scalar_lea.vmem [#allocation3], 64
    %v268 = vld [vmem:[%s267] sm:$0xff]
    %v269 = vadd.f32 %v268, %v262
    %270 = vst [vmem:[%s267] sm:$0xff] %v269
    %v271 = vsub.f32 16.0, %v90
    %v272 = vadd.f32 %v90, -14.0
    %v273 = vmin.f32 %v271, %v272
    %v274 = vmax.f32 %v273, 0.0
    %v275 = vmul.f32 %v274, %v91
    %v276 = vsub.f32 16.0, %v93
    %v277 = vadd.f32 %v93, -14.0
    %v278 = vmin.f32 %v276, %v277
    %v279 = vmax.f32 %v278, 0.0
    %v280 = vmul.f32 %v279, %v94
    %v281 = vadd.f32 %v274, %v279
    %v282 = vadd.f32 %v275, %v280
    %s283 = scalar_lea.vmem [#allocation2], 72
    %v284 = vld [vmem:[%s283] sm:$0xff]
    %v285 = vadd.f32 %v284, %v281
    %286 = vst [vmem:[%s283] sm:$0xff] %v285
    %s287 = scalar_lea.vmem [#allocation3], 72
    %v288 = vld [vmem:[%s287] sm:$0xff]
    %v289 = vadd.f32 %v288, %v282
    %290 = vst [vmem:[%s287] sm:$0xff] %v289
    %v291 = vsub.f32 15.0, %v90
    %v292 = vadd.f32 %v90, -13.0
    %v293 = vmin.f32 %v291, %v292
    %v294 = vmax.f32 %v293, 0.0
    %v295 = vmul.f32 %v294, %v91
    %v296 = vsub.f32 15.0, %v93
    %v297 = vadd.f32 %v93, -13.0
    %v298 = vmin.f32 %v296, %v297
    %v299 = vmax.f32 %v298, 0.0
    %v300 = vmul.f32 %v299, %v94
    %v301 = vadd.f32 %v294, %v299
    %v302 = vadd.f32 %v295, %v300
    %s303 = scalar_lea.vmem [#allocation2], 80
    %v304 = vld [vmem:[%s303] sm:$0xff]
    %v305 = vadd.f32 %v304, %v301
    %306 = vst [vmem:[%s303] sm:$0xff] %v305
    %s307 = scalar_lea.vmem [#allocation3], 80
    %v308 = vld [vmem:[%s307] sm:$0xff]
    %v309 = vadd.f32 %v308, %v302
    %310 = vst [vmem:[%s307] sm:$0xff] %v309
    %v311 = vsub.f32 14.0, %v90
    %v312 = vadd.f32 %v90, -12.0
    %v313 = vmin.f32 %v311, %v312
    %v314 = vmax.f32 %v313, 0.0
    %v315 = vmul.f32 %v314, %v91
    %v316 = vsub.f32 14.0, %v93
    %v317 = vadd.f32 %v93, -12.0
    %v318 = vmin.f32 %v316, %v317
    %v319 = vmax.f32 %v318, 0.0
    %v320 = vmul.f32 %v319, %v94
    %v321 = vadd.f32 %v314, %v319
    %v322 = vadd.f32 %v315, %v320
    %s323 = scalar_lea.vmem [#allocation2], 88
    %v324 = vld [vmem:[%s323] sm:$0xff]
    %v325 = vadd.f32 %v324, %v321
    %326 = vst [vmem:[%s323] sm:$0xff] %v325
    %s327 = scalar_lea.vmem [#allocation3], 88
    %v328 = vld [vmem:[%s327] sm:$0xff]
    %v329 = vadd.f32 %v328, %v322
    %330 = vst [vmem:[%s327] sm:$0xff] %v329
    %v331 = vsub.f32 13.0, %v90
    %v332 = vadd.f32 %v90, -11.0
    %v333 = vmin.f32 %v331, %v332
    %v334 = vmax.f32 %v333, 0.0
    %v335 = vmul.f32 %v334, %v91
    %v336 = vsub.f32 13.0, %v93
    %v337 = vadd.f32 %v93, -11.0
    %v338 = vmin.f32 %v336, %v337
    %v339 = vmax.f32 %v338, 0.0
    %v340 = vmul.f32 %v339, %v94
    %v341 = vadd.f32 %v334, %v339
    %v342 = vadd.f32 %v335, %v340
    %s343 = scalar_lea.vmem [#allocation2], 96
    %v344 = vld [vmem:[%s343] sm:$0xff]
    %v345 = vadd.f32 %v344, %v341
    %346 = vst [vmem:[%s343] sm:$0xff] %v345
    %s347 = scalar_lea.vmem [#allocation3], 96
    %v348 = vld [vmem:[%s347] sm:$0xff]
    %v349 = vadd.f32 %v348, %v342
    %350 = vst [vmem:[%s347] sm:$0xff] %v349
    %v351 = vsub.f32 12.0, %v90
    %v352 = vadd.f32 %v90, -10.0
    %v353 = vmin.f32 %v351, %v352
    %v354 = vmax.f32 %v353, 0.0
    %v355 = vmul.f32 %v354, %v91
    %v356 = vsub.f32 12.0, %v93
    %v357 = vadd.f32 %v93, -10.0
    %v358 = vmin.f32 %v356, %v357
    %v359 = vmax.f32 %v358, 0.0
    %v360 = vmul.f32 %v359, %v94
    %v361 = vadd.f32 %v354, %v359
    %v362 = vadd.f32 %v355, %v360
    %s363 = scalar_lea.vmem [#allocation2], 104
    %v364 = vld [vmem:[%s363] sm:$0xff]
    %v365 = vadd.f32 %v364, %v361
    %366 = vst [vmem:[%s363] sm:$0xff] %v365
    %s367 = scalar_lea.vmem [#allocation3], 104
    %v368 = vld [vmem:[%s367] sm:$0xff]
    %v369 = vadd.f32 %v368, %v362
    %370 = vst [vmem:[%s367] sm:$0xff] %v369
    %v371 = vsub.f32 11.0, %v90
    %v372 = vadd.f32 %v90, -9.0
    %v373 = vmin.f32 %v371, %v372
    %v374 = vmax.f32 %v373, 0.0
    %v375 = vmul.f32 %v374, %v91
    %v376 = vsub.f32 11.0, %v93
    %v377 = vadd.f32 %v93, -9.0
    %v378 = vmin.f32 %v376, %v377
    %v379 = vmax.f32 %v378, 0.0
    %v380 = vmul.f32 %v379, %v94
    %v381 = vadd.f32 %v374, %v379
    %v382 = vadd.f32 %v375, %v380
    %s383 = scalar_lea.vmem [#allocation2], 112
    %v384 = vld [vmem:[%s383] sm:$0xff]
    %v385 = vadd.f32 %v384, %v381
    %386 = vst [vmem:[%s383] sm:$0xff] %v385
    %s387 = scalar_lea.vmem [#allocation3], 112
    %v388 = vld [vmem:[%s387] sm:$0xff]
    %v389 = vadd.f32 %v388, %v382
    %390 = vst [vmem:[%s387] sm:$0xff] %v389
    %v391 = vsub.f32 10.0, %v90
    %v392 = vadd.f32 %v90, -8.0
    %v393 = vmin.f32 %v391, %v392
    %v394 = vmax.f32 %v393, 0.0
    %v395 = vmul.f32 %v394, %v91
    %v396 = vsub.f32 10.0, %v93
    %v397 = vadd.f32 %v93, -8.0
    %v398 = vmin.f32 %v396, %v397
    %v399 = vmax.f32 %v398, 0.0
    %v400 = vmul.f32 %v399, %v94
    %v401 = vadd.f32 %v394, %v399
    %v402 = vadd.f32 %v395, %v400
    %s403 = scalar_lea.vmem [#allocation2], 120
    %v404 = vld [vmem:[%s403] sm:$0xff]
    %v405 = vadd.f32 %v404, %v401
    %406 = vst [vmem:[%s403] sm:$0xff] %v405
    %s407 = scalar_lea.vmem [#allocation3], 120
    %v408 = vld [vmem:[%s407] sm:$0xff]
    %v409 = vadd.f32 %v408, %v402
    %410 = vst [vmem:[%s407] sm:$0xff] %v409
    %v411 = vsub.f32 9.0, %v90
    %v412 = vadd.f32 %v90, -7.0
    %v413 = vmin.f32 %v411, %v412
    %v414 = vmax.f32 %v413, 0.0
    %v415 = vmul.f32 %v414, %v91
    %v416 = vsub.f32 9.0, %v93
    %v417 = vadd.f32 %v93, -7.0
    %v418 = vmin.f32 %v416, %v417
    %v419 = vmax.f32 %v418, 0.0
    %v420 = vmul.f32 %v419, %v94
    %v421 = vadd.f32 %v414, %v419
    %v422 = vadd.f32 %v415, %v420
    %s423 = scalar_lea.vmem [#allocation2], 128
    %v424 = vld [vmem:[%s423] sm:$0xff]
    %v425 = vadd.f32 %v424, %v421
    %426 = vst [vmem:[%s423] sm:$0xff] %v425
    %s427 = scalar_lea.vmem [#allocation3], 128
    %v428 = vld [vmem:[%s427] sm:$0xff]
    %v429 = vadd.f32 %v428, %v422
    %430 = vst [vmem:[%s427] sm:$0xff] %v429
    %v431 = vsub.f32 8.0, %v90
    %v432 = vadd.f32 %v90, -6.0
    %v433 = vmin.f32 %v431, %v432
    %v434 = vmax.f32 %v433, 0.0
    %v435 = vmul.f32 %v434, %v91
    %v436 = vsub.f32 8.0, %v93
    %v437 = vadd.f32 %v93, -6.0
    %v438 = vmin.f32 %v436, %v437
    %v439 = vmax.f32 %v438, 0.0
    %v440 = vmul.f32 %v439, %v94
    %v441 = vadd.f32 %v434, %v439
    %v442 = vadd.f32 %v435, %v440
    %s443 = scalar_lea.vmem [#allocation2], 136
    %v444 = vld [vmem:[%s443] sm:$0xff]
    %v445 = vadd.f32 %v444, %v441
    %446 = vst [vmem:[%s443] sm:$0xff] %v445
    %s447 = scalar_lea.vmem [#allocation3], 136
    %v448 = vld [vmem:[%s447] sm:$0xff]
    %v449 = vadd.f32 %v448, %v442
    %450 = vst [vmem:[%s447] sm:$0xff] %v449
    %v451 = vsub.f32 7.0, %v90
    %v452 = vadd.f32 %v90, -5.0
    %v453 = vmin.f32 %v451, %v452
    %v454 = vmax.f32 %v453, 0.0
    %v455 = vmul.f32 %v454, %v91
    %v456 = vsub.f32 7.0, %v93
    %v457 = vadd.f32 %v93, -5.0
    %v458 = vmin.f32 %v456, %v457
    %v459 = vmax.f32 %v458, 0.0
    %v460 = vmul.f32 %v459, %v94
    %v461 = vadd.f32 %v454, %v459
    %v462 = vadd.f32 %v455, %v460
    %s463 = scalar_lea.vmem [#allocation2], 144
    %v464 = vld [vmem:[%s463] sm:$0xff]
    %v465 = vadd.f32 %v464, %v461
    %466 = vst [vmem:[%s463] sm:$0xff] %v465
    %s467 = scalar_lea.vmem [#allocation3], 144
    %v468 = vld [vmem:[%s467] sm:$0xff]
    %v469 = vadd.f32 %v468, %v462
    %470 = vst [vmem:[%s467] sm:$0xff] %v469
    %v471 = vsub.f32 6.0, %v90
    %v472 = vadd.f32 %v90, -4.0
    %v473 = vmin.f32 %v471, %v472
    %v474 = vmax.f32 %v473, 0.0
    %v475 = vmul.f32 %v474, %v91
    %v476 = vsub.f32 6.0, %v93
    %v477 = vadd.f32 %v93, -4.0
    %v478 = vmin.f32 %v476, %v477
    %v479 = vmax.f32 %v478, 0.0
    %v480 = vmul.f32 %v479, %v94
    %v481 = vadd.f32 %v474, %v479
    %v482 = vadd.f32 %v475, %v480
    %s483 = scalar_lea.vmem [#allocation2], 152
    %v484 = vld [vmem:[%s483] sm:$0xff]
    %v485 = vadd.f32 %v484, %v481
    %486 = vst [vmem:[%s483] sm:$0xff] %v485
    %s487 = scalar_lea.vmem [#allocation3], 152
    %v488 = vld [vmem:[%s487] sm:$0xff]
    %v489 = vadd.f32 %v488, %v482
    %490 = vst [vmem:[%s487] sm:$0xff] %v489
    %v491 = vsub.f32 5.0, %v90
    %v492 = vadd.f32 %v90, -3.0
    %v493 = vmin.f32 %v491, %v492
    %v494 = vmax.f32 %v493, 0.0
    %v495 = vmul.f32 %v494, %v91
    %v496 = vsub.f32 5.0, %v93
    %v497 = vadd.f32 %v93, -3.0
    %v498 = vmin.f32 %v496, %v497
    %v499 = vmax.f32 %v498, 0.0
    %v500 = vmul.f32 %v499, %v94
    %v501 = vadd.f32 %v494, %v499
    %v502 = vadd.f32 %v495, %v500
    %s503 = scalar_lea.vmem [#allocation2], 160
    %v504 = vld [vmem:[%s503] sm:$0xff]
    %v505 = vadd.f32 %v504, %v501
    %506 = vst [vmem:[%s503] sm:$0xff] %v505
    %s507 = scalar_lea.vmem [#allocation3], 160
    %v508 = vld [vmem:[%s507] sm:$0xff]
    %v509 = vadd.f32 %v508, %v502
    %510 = vst [vmem:[%s507] sm:$0xff] %v509
    %v511 = vsub.f32 4.0, %v90
    %v512 = vadd.f32 %v90, -2.0
    %v513 = vmin.f32 %v511, %v512
    %v514 = vmax.f32 %v513, 0.0
    %v515 = vmul.f32 %v514, %v91
    %v516 = vsub.f32 4.0, %v93
    %v517 = vadd.f32 %v93, -2.0
    %v518 = vmin.f32 %v516, %v517
    %v519 = vmax.f32 %v518, 0.0
    %v520 = vmul.f32 %v519, %v94
    %v521 = vadd.f32 %v514, %v519
    %v522 = vadd.f32 %v515, %v520
    %s523 = scalar_lea.vmem [#allocation2], 168
    %v524 = vld [vmem:[%s523] sm:$0xff]
    %v525 = vadd.f32 %v524, %v521
    %526 = vst [vmem:[%s523] sm:$0xff] %v525
    %s527 = scalar_lea.vmem [#allocation3], 168
    %v528 = vld [vmem:[%s527] sm:$0xff]
    %v529 = vadd.f32 %v528, %v522
    %530 = vst [vmem:[%s527] sm:$0xff] %v529
    %v531 = vsub.f32 3.0, %v90
    %v532 = vadd.f32 %v90, -1.0
    %v533 = vmin.f32 %v531, %v532
    %v534 = vmax.f32 %v533, 0.0
    %v535 = vmul.f32 %v534, %v91
    %v536 = vsub.f32 3.0, %v93
    %v537 = vadd.f32 %v93, -1.0
    %v538 = vmin.f32 %v536, %v537
    %v539 = vmax.f32 %v538, 0.0
    %v540 = vmul.f32 %v539, %v94
    %v541 = vadd.f32 %v534, %v539
    %v542 = vadd.f32 %v535, %v540
    %s543 = scalar_lea.vmem [#allocation2], 176
    %v544 = vld [vmem:[%s543] sm:$0xff]
    %v545 = vadd.f32 %v544, %v541
    %546 = vst [vmem:[%s543] sm:$0xff] %v545
    %s547 = scalar_lea.vmem [#allocation3], 176
    %v548 = vld [vmem:[%s547] sm:$0xff]
    %v549 = vadd.f32 %v548, %v542
    %550 = vst [vmem:[%s547] sm:$0xff] %v549
    %v551 = vsub.f32 2.0, %v90
    %v552 = vadd.f32 %v90, 0.0
    %v553 = vmin.f32 %v551, %v552
    %v554 = vmax.f32 %v553, 0.0
    %v555 = vmul.f32 %v554, %v91
    %v556 = vsub.f32 2.0, %v93
    %v557 = vadd.f32 %v93, 0.0
    %v558 = vmin.f32 %v556, %v557
    %v559 = vmax.f32 %v558, 0.0
    %v560 = vmul.f32 %v559, %v94
    %v561 = vadd.f32 %v554, %v559
    %v562 = vadd.f32 %v555, %v560
    %s563 = scalar_lea.vmem [#allocation2], 184
    %v564 = vld [vmem:[%s563] sm:$0xff]
    %v565 = vadd.f32 %v564, %v561
    %566 = vst [vmem:[%s563] sm:$0xff] %v565
    %s567 = scalar_lea.vmem [#allocation3], 184
    %v568 = vld [vmem:[%s567] sm:$0xff]
    %v569 = vadd.f32 %v568, %v562
    %570 = vst [vmem:[%s567] sm:$0xff] %v569
    %v571 = vsub.f32 1.0, %v90
    %v572 = vmin.f32 %v571, 1.0
    %v573 = vmax.f32 %v572, 0.0
    %v574 = vmul.f32 %v573, %v91
    %v575 = vsub.f32 1.0, %v93
    %v576 = vmin.f32 %v575, 1.0
    %v577 = vmax.f32 %v576, 0.0
    %v578 = vmul.f32 %v577, %v94
    %v579 = vadd.f32 %v573, %v577
    %v580 = vadd.f32 %v574, %v578
    %s581 = scalar_lea.vmem [#allocation2], 192
    %v582 = vld [vmem:[%s581] sm:$0xff]
    %v583 = vadd.f32 %v582, %v579
    %584 = vst [vmem:[%s581] sm:$0xff] %v583
    %s585 = scalar_lea.vmem [#allocation3], 192
    %v586 = vld [vmem:[%s585] sm:$0xff]
    %v587 = vadd.f32 %v586, %v580
    %588 = vst [vmem:[%s585] sm:$0xff] %v587
    // Predicated region
    $region22: #{tpu_custom_call.1} parent=1 // pred_check
      %p589 = pneg %p35
    $region23: #{tpu_custom_call.1} parent=1 // pred_check_branch
      %591 = sbr.rel (%p589) target = $region25
    $region24: #{tpu_custom_call.1} parent=1 // pred_region
      %v592 = vld [vmem:[#allocation2] sm:$0xff]
      %v593 = vld [vmem:[#allocation2 + $0x8] sm:$0xff]
      %v594 = vld [vmem:[#allocation2 + $0x10] sm:$0xff]
      %v595 = vld [vmem:[#allocation2 + $0x18] sm:$0xff]
      %v596 = vld [vmem:[#allocation2 + $0x20] sm:$0xff]
      %v597 = vld [vmem:[#allocation2 + $0x28] sm:$0xff]
      %v598 = vld [vmem:[#allocation2 + $0x30] sm:$0xff]
      %v599 = vld [vmem:[#allocation2 + $0x38] sm:$0xff]
      %v600 = vld [vmem:[#allocation2 + $0x40] sm:$0xff]
      %v601 = vld [vmem:[#allocation2 + $0x48] sm:$0xff]
      %v602 = vld [vmem:[#allocation2 + $0x50] sm:$0xff]
      %v603 = vld [vmem:[#allocation2 + $0x58] sm:$0xff]
      %v604 = vld [vmem:[#allocation2 + $0x60] sm:$0xff]
      %v605 = vld [vmem:[#allocation2 + $0x68] sm:$0xff]
      %v606 = vld [vmem:[#allocation2 + $0x70] sm:$0xff]
      %v607 = vld [vmem:[#allocation2 + $0x78] sm:$0xff]
      %v608 = vld [vmem:[#allocation2 + $0x80] sm:$0xff]
      %v609 = vld [vmem:[#allocation2 + $0x88] sm:$0xff]
      %v610 = vld [vmem:[#allocation2 + $0x90] sm:$0xff]
      %v611 = vld [vmem:[#allocation2 + $0x98] sm:$0xff]
      %v612 = vld [vmem:[#allocation2 + $0xa0] sm:$0xff]
      %v613 = vld [vmem:[#allocation2 + $0xa8] sm:$0xff]
      %v614 = vld [vmem:[#allocation2 + $0xb0] sm:$0xff]
      %v615 = vld [vmem:[#allocation2 + $0xb8] sm:$0xff]
      %v616 = vld [vmem:[#allocation2 + $0xc0] sm:$0xff]
      %617 = vadd.xlane.f32.xlu0 %v592
      %v618 = vpop.xlane.xlu0 %617
      %619 = vadd.xlane.f32.xlu0 %v593
      %v620 = vpop.xlane.xlu0 %619
      %621 = vadd.xlane.f32.xlu0 %v594
      %v622 = vpop.xlane.xlu0 %621
      %623 = vadd.xlane.f32.xlu0 %v595
      %v624 = vpop.xlane.xlu0 %623
      %625 = vadd.xlane.f32.xlu0 %v596
      %v626 = vpop.xlane.xlu0 %625
      %627 = vadd.xlane.f32.xlu0 %v597
      %v628 = vpop.xlane.xlu0 %627
      %629 = vadd.xlane.f32.xlu0 %v598
      %v630 = vpop.xlane.xlu0 %629
      %631 = vadd.xlane.f32.xlu0 %v599
      %v632 = vpop.xlane.xlu0 %631
      %633 = vadd.xlane.f32.xlu0 %v600
      %v634 = vpop.xlane.xlu0 %633
      %635 = vadd.xlane.f32.xlu0 %v601
      %v636 = vpop.xlane.xlu0 %635
      %637 = vadd.xlane.f32.xlu0 %v602
      %v638 = vpop.xlane.xlu0 %637
      %639 = vadd.xlane.f32.xlu0 %v603
      %v640 = vpop.xlane.xlu0 %639
      %641 = vadd.xlane.f32.xlu0 %v604
      %v642 = vpop.xlane.xlu0 %641
      %643 = vadd.xlane.f32.xlu0 %v605
      %v644 = vpop.xlane.xlu0 %643
      %645 = vadd.xlane.f32.xlu0 %v606
      %v646 = vpop.xlane.xlu0 %645
      %647 = vadd.xlane.f32.xlu0 %v607
      %v648 = vpop.xlane.xlu0 %647
      %649 = vadd.xlane.f32.xlu0 %v608
      %v650 = vpop.xlane.xlu0 %649
      %651 = vadd.xlane.f32.xlu0 %v609
      %v652 = vpop.xlane.xlu0 %651
      %653 = vadd.xlane.f32.xlu0 %v610
      %v654 = vpop.xlane.xlu0 %653
      %655 = vadd.xlane.f32.xlu0 %v611
      %v656 = vpop.xlane.xlu0 %655
      %657 = vadd.xlane.f32.xlu0 %v612
      %v658 = vpop.xlane.xlu0 %657
      %659 = vadd.xlane.f32.xlu0 %v613
      %v660 = vpop.xlane.xlu0 %659
      %661 = vadd.xlane.f32.xlu0 %v614
      %v662 = vpop.xlane.xlu0 %661
      %663 = vadd.xlane.f32.xlu0 %v615
      %v664 = vpop.xlane.xlu0 %663
      %665 = vadd.xlane.f32.xlu0 %v616
      %v666 = vpop.xlane.xlu0 %665
      %v692 = vlaneseq
      %v693 = vand.u32 %v692, 127
      %v694 = vlaneseq
      %v695 = vshrl.u32 %v694, 7
      %v696 = vsub.s32 %v693, %v695
      %v697 = vrot.slane %v618, %v696
      %v698 = vlaneseq
      %v699 = vshrl.u32 %v698, 7
      %v700 = vsub.s32 %v693, %v699
      %v701 = vrot.slane %v620, %v700
      %v702 = vlaneseq
      %v703 = vshrl.u32 %v702, 7
      %v704 = vsub.s32 %v693, %v703
      %v705 = vrot.slane %v622, %v704
      %v706 = vlaneseq
      %v707 = vshrl.u32 %v706, 7
      %v708 = vsub.s32 %v693, %v707
      %v709 = vrot.slane %v624, %v708
      %v710 = vlaneseq
      %v711 = vshrl.u32 %v710, 7
      %v712 = vsub.s32 %v693, %v711
      %v713 = vrot.slane %v626, %v712
      %v714 = vlaneseq
      %v715 = vshrl.u32 %v714, 7
      %v716 = vsub.s32 %v693, %v715
      %v717 = vrot.slane %v628, %v716
      %v718 = vlaneseq
      %v719 = vshrl.u32 %v718, 7
      %v720 = vsub.s32 %v693, %v719
      %v721 = vrot.slane %v630, %v720
      %v722 = vlaneseq
      %v723 = vshrl.u32 %v722, 7
      %v724 = vsub.s32 %v693, %v723
      %v725 = vrot.slane %v632, %v724
      %v726 = vlaneseq
      %v727 = vshrl.u32 %v726, 7
      %v728 = vsub.s32 %v693, %v727
      %v729 = vrot.slane %v634, %v728
      %v730 = vlaneseq
      %v731 = vshrl.u32 %v730, 7
      %v732 = vsub.s32 %v693, %v731
      %v733 = vrot.slane %v636, %v732
      %v734 = vlaneseq
      %v735 = vshrl.u32 %v734, 7
      %v736 = vsub.s32 %v693, %v735
      %v737 = vrot.slane %v638, %v736
      %v738 = vlaneseq
      %v739 = vshrl.u32 %v738, 7
      %v740 = vsub.s32 %v693, %v739
      %v741 = vrot.slane %v640, %v740
      %v742 = vlaneseq
      %v743 = vshrl.u32 %v742, 7
      %v744 = vsub.s32 %v693, %v743
      %v745 = vrot.slane %v642, %v744
      %v746 = vlaneseq
      %v747 = vshrl.u32 %v746, 7
      %v748 = vsub.s32 %v693, %v747
      %v749 = vrot.slane %v644, %v748
      %v750 = vlaneseq
      %v751 = vshrl.u32 %v750, 7
      %v752 = vsub.s32 %v693, %v751
      %v753 = vrot.slane %v646, %v752
      %v754 = vlaneseq
      %v755 = vshrl.u32 %v754, 7
      %v756 = vsub.s32 %v693, %v755
      %v757 = vrot.slane %v648, %v756
      %v758 = vlaneseq
      %v759 = vshrl.u32 %v758, 7
      %v760 = vsub.s32 %v693, %v759
      %v761 = vrot.slane %v650, %v760
      %v762 = vlaneseq
      %v763 = vshrl.u32 %v762, 7
      %v764 = vsub.s32 %v693, %v763
      %v765 = vrot.slane %v652, %v764
      %v766 = vlaneseq
      %v767 = vshrl.u32 %v766, 7
      %v768 = vsub.s32 %v693, %v767
      %v769 = vrot.slane %v654, %v768
      %v770 = vlaneseq
      %v771 = vshrl.u32 %v770, 7
      %v772 = vsub.s32 %v693, %v771
      %v773 = vrot.slane %v656, %v772
      %v774 = vlaneseq
      %v775 = vshrl.u32 %v774, 7
      %v776 = vsub.s32 %v693, %v775
      %v777 = vrot.slane %v658, %v776
      %v778 = vlaneseq
      %v779 = vshrl.u32 %v778, 7
      %v780 = vsub.s32 %v693, %v779
      %v781 = vrot.slane %v660, %v780
      %v782 = vlaneseq
      %v783 = vshrl.u32 %v782, 7
      %v784 = vsub.s32 %v693, %v783
      %v785 = vrot.slane %v662, %v784
      %v786 = vlaneseq
      %v787 = vshrl.u32 %v786, 7
      %v788 = vsub.s32 %v693, %v787
      %v789 = vrot.slane %v664, %v788
      %v790 = vlaneseq
      %v791 = vshrl.u32 %v790, 7
      %v792 = vsub.s32 %v693, %v791
      %v793 = vrot.slane %v666, %v792
      %vm794 = vcmask 1041409
      %v795 = vsel %vm794, %v701, %v697
      %vm796 = vcmask 1042434
      %v797 = vsel %vm796, %v705, %v795
      %vm798 = vcmask 1043459
      %v799 = vsel %vm798, %v709, %v797
      %vm800 = vcmask 1044484
      %v801 = vsel %vm800, %v713, %v799
      %vm802 = vcmask 1045509
      %v803 = vsel %vm802, %v717, %v801
      %vm804 = vcmask 1046534
      %v805 = vsel %vm804, %v721, %v803
      %vm806 = vcmask 1047559
      %v807 = vsel %vm806, %v725, %v805
      %v808 = vsel %vm794, %v733, %v729
      %v809 = vsel %vm796, %v737, %v808
      %v810 = vsel %vm798, %v741, %v809
      %v811 = vsel %vm800, %v745, %v810
      %v812 = vsel %vm802, %v749, %v811
      %v813 = vsel %vm804, %v753, %v812
      %v814 = vsel %vm806, %v757, %v813
      %v815 = vsel %vm794, %v765, %v761
      %v816 = vsel %vm796, %v769, %v815
      %v817 = vsel %vm798, %v773, %v816
      %v818 = vsel %vm800, %v777, %v817
      %v819 = vsel %vm802, %v781, %v818
      %v820 = vsel %vm804, %v785, %v819
      %v821 = vsel %vm806, %v789, %v820
      %826 = vxpose.xlu0.b32.start [1/16] %v807, 128
      %827 = vxpose.xlu0.b32.cont [2/16] %v814, 128
      %828 = vxpose.xlu0.b32.cont [3/16] %v821, 128
      %829 = vxpose.xlu0.b32.cont [4/16] %v793, 128
      %830 = vxpose.xlu0.b32.cont [5/16] 0.0, 128
      %831 = vxpose.xlu0.b32.cont [6/16] 0.0, 128
      %832 = vxpose.xlu0.b32.cont [7/16] 0.0, 128
      %833 = vxpose.xlu0.b32.cont [8/16] 0.0, 128
      %834 = vxpose.xlu0.b32.cont [9/16] 0.0, 128
      %835 = vxpose.xlu0.b32.cont [10/16] 0.0, 128
      %836 = vxpose.xlu0.b32.cont [11/16] 0.0, 128
      %837 = vxpose.xlu0.b32.cont [12/16] 0.0, 128
      %838 = vxpose.xlu0.b32.cont [13/16] 0.0, 128
      %839 = vxpose.xlu0.b32.cont [14/16] 0.0, 128
      %840 = vxpose.xlu0.b32.cont [15/16] 0.0, 128
      %841 = vxpose.xlu0.b32.end [16/16] 0.0, 128
      %v842 = vpop.trf.xlu0
      %v843 = vpop.trf.xlu0
      %v844 = vpop.trf.xlu0
      %v845 = vpop.trf.xlu0
      %v846 = vpop.trf.xlu0
      %v847 = vpop.trf.xlu0
      %v848 = vpop.trf.xlu0
      %v849 = vpop.trf.xlu0
      %v850 = vpop.trf.xlu0
      %v851 = vpop.trf.xlu0
      %v852 = vpop.trf.xlu0
      %v853 = vpop.trf.xlu0
      %v854 = vpop.trf.xlu0
      %v855 = vpop.trf.xlu0
      %v856 = vpop.trf.xlu0
      %v857 = vpop.trf.xlu0
      %v858 = vld [vmem:[#allocation3] sm:$0xff]
      %v859 = vld [vmem:[#allocation3 + $0x8] sm:$0xff]
      %v860 = vld [vmem:[#allocation3 + $0x10] sm:$0xff]
      %v861 = vld [vmem:[#allocation3 + $0x18] sm:$0xff]
      %v862 = vld [vmem:[#allocation3 + $0x20] sm:$0xff]
      %v863 = vld [vmem:[#allocation3 + $0x28] sm:$0xff]
      %v864 = vld [vmem:[#allocation3 + $0x30] sm:$0xff]
      %v865 = vld [vmem:[#allocation3 + $0x38] sm:$0xff]
      %v866 = vld [vmem:[#allocation3 + $0x40] sm:$0xff]
      %v867 = vld [vmem:[#allocation3 + $0x48] sm:$0xff]
      %v868 = vld [vmem:[#allocation3 + $0x50] sm:$0xff]
      %v869 = vld [vmem:[#allocation3 + $0x58] sm:$0xff]
      %v870 = vld [vmem:[#allocation3 + $0x60] sm:$0xff]
      %v871 = vld [vmem:[#allocation3 + $0x68] sm:$0xff]
      %v872 = vld [vmem:[#allocation3 + $0x70] sm:$0xff]
      %v873 = vld [vmem:[#allocation3 + $0x78] sm:$0xff]
      %v874 = vld [vmem:[#allocation3 + $0x80] sm:$0xff]
      %v875 = vld [vmem:[#allocation3 + $0x88] sm:$0xff]
      %v876 = vld [vmem:[#allocation3 + $0x90] sm:$0xff]
      %v877 = vld [vmem:[#allocation3 + $0x98] sm:$0xff]
      %v878 = vld [vmem:[#allocation3 + $0xa0] sm:$0xff]
      %v879 = vld [vmem:[#allocation3 + $0xa8] sm:$0xff]
      %v880 = vld [vmem:[#allocation3 + $0xb0] sm:$0xff]
      %v881 = vld [vmem:[#allocation3 + $0xb8] sm:$0xff]
      %v882 = vld [vmem:[#allocation3 + $0xc0] sm:$0xff]
      %883 = vadd.xlane.f32.xlu0 %v858
      %v884 = vpop.xlane.xlu0 %883
      %885 = vadd.xlane.f32.xlu0 %v859
      %v886 = vpop.xlane.xlu0 %885
      %887 = vadd.xlane.f32.xlu0 %v860
      %v888 = vpop.xlane.xlu0 %887
      %889 = vadd.xlane.f32.xlu0 %v861
      %v890 = vpop.xlane.xlu0 %889
      %891 = vadd.xlane.f32.xlu0 %v862
      %v892 = vpop.xlane.xlu0 %891
      %893 = vadd.xlane.f32.xlu0 %v863
      %v894 = vpop.xlane.xlu0 %893
      %895 = vadd.xlane.f32.xlu0 %v864
      %v896 = vpop.xlane.xlu0 %895
      %897 = vadd.xlane.f32.xlu0 %v865
      %v898 = vpop.xlane.xlu0 %897
      %899 = vadd.xlane.f32.xlu0 %v866
      %v900 = vpop.xlane.xlu0 %899
      %901 = vadd.xlane.f32.xlu0 %v867
      %v902 = vpop.xlane.xlu0 %901
      %903 = vadd.xlane.f32.xlu0 %v868
      %v904 = vpop.xlane.xlu0 %903
      %905 = vadd.xlane.f32.xlu0 %v869
      %v906 = vpop.xlane.xlu0 %905
      %907 = vadd.xlane.f32.xlu0 %v870
      %v908 = vpop.xlane.xlu0 %907
      %909 = vadd.xlane.f32.xlu0 %v871
      %v910 = vpop.xlane.xlu0 %909
      %911 = vadd.xlane.f32.xlu0 %v872
      %v912 = vpop.xlane.xlu0 %911
      %913 = vadd.xlane.f32.xlu0 %v873
      %v914 = vpop.xlane.xlu0 %913
      %915 = vadd.xlane.f32.xlu0 %v874
      %v916 = vpop.xlane.xlu0 %915
      %917 = vadd.xlane.f32.xlu0 %v875
      %v918 = vpop.xlane.xlu0 %917
      %919 = vadd.xlane.f32.xlu0 %v876
      %v920 = vpop.xlane.xlu0 %919
      %921 = vadd.xlane.f32.xlu0 %v877
      %v922 = vpop.xlane.xlu0 %921
      %923 = vadd.xlane.f32.xlu0 %v878
      %v924 = vpop.xlane.xlu0 %923
      %925 = vadd.xlane.f32.xlu0 %v879
      %v926 = vpop.xlane.xlu0 %925
      %927 = vadd.xlane.f32.xlu0 %v880
      %v928 = vpop.xlane.xlu0 %927
      %929 = vadd.xlane.f32.xlu0 %v881
      %v930 = vpop.xlane.xlu0 %929
      %931 = vadd.xlane.f32.xlu0 %v882
      %v932 = vpop.xlane.xlu0 %931
      %v958 = vlaneseq
      %v959 = vshrl.u32 %v958, 7
      %v960 = vsub.s32 %v693, %v959
      %v961 = vrot.slane %v884, %v960
      %v962 = vlaneseq
      %v963 = vshrl.u32 %v962, 7
      %v964 = vsub.s32 %v693, %v963
      %v965 = vrot.slane %v886, %v964
      %v966 = vlaneseq
      %v967 = vshrl.u32 %v966, 7
      %v968 = vsub.s32 %v693, %v967
      %v969 = vrot.slane %v888, %v968
      %v970 = vlaneseq
      %v971 = vshrl.u32 %v970, 7
      %v972 = vsub.s32 %v693, %v971
      %v973 = vrot.slane %v890, %v972
      %v974 = vlaneseq
      %v975 = vshrl.u32 %v974, 7
      %v976 = vsub.s32 %v693, %v975
      %v977 = vrot.slane %v892, %v976
      %v978 = vlaneseq
      %v979 = vshrl.u32 %v978, 7
      %v980 = vsub.s32 %v693, %v979
      %v981 = vrot.slane %v894, %v980
      %v982 = vlaneseq
      %v983 = vshrl.u32 %v982, 7
      %v984 = vsub.s32 %v693, %v983
      %v985 = vrot.slane %v896, %v984
      %v986 = vlaneseq
      %v987 = vshrl.u32 %v986, 7
      %v988 = vsub.s32 %v693, %v987
      %v989 = vrot.slane %v898, %v988
      %v990 = vlaneseq
      %v991 = vshrl.u32 %v990, 7
      %v992 = vsub.s32 %v693, %v991
      %v993 = vrot.slane %v900, %v992
      %v994 = vlaneseq
      %v995 = vshrl.u32 %v994, 7
      %v996 = vsub.s32 %v693, %v995
      %v997 = vrot.slane %v902, %v996
      %v998 = vlaneseq
      %v999 = vshrl.u32 %v998, 7
      %v1000 = vsub.s32 %v693, %v999
      %v1001 = vrot.slane %v904, %v1000
      %v1002 = vlaneseq
      %v1003 = vshrl.u32 %v1002, 7
      %v1004 = vsub.s32 %v693, %v1003
      %v1005 = vrot.slane %v906, %v1004
      %v1006 = vlaneseq
      %v1007 = vshrl.u32 %v1006, 7
      %v1008 = vsub.s32 %v693, %v1007
      %v1009 = vrot.slane %v908, %v1008
      %v1010 = vlaneseq
      %v1011 = vshrl.u32 %v1010, 7
      %v1012 = vsub.s32 %v693, %v1011
      %v1013 = vrot.slane %v910, %v1012
      %v1014 = vlaneseq
      %v1015 = vshrl.u32 %v1014, 7
      %v1016 = vsub.s32 %v693, %v1015
      %v1017 = vrot.slane %v912, %v1016
      %v1018 = vlaneseq
      %v1019 = vshrl.u32 %v1018, 7
      %v1020 = vsub.s32 %v693, %v1019
      %v1021 = vrot.slane %v914, %v1020
      %v1022 = vlaneseq
      %v1023 = vshrl.u32 %v1022, 7
      %v1024 = vsub.s32 %v693, %v1023
      %v1025 = vrot.slane %v916, %v1024
      %v1026 = vlaneseq
      %v1027 = vshrl.u32 %v1026, 7
      %v1028 = vsub.s32 %v693, %v1027
      %v1029 = vrot.slane %v918, %v1028
      %v1030 = vlaneseq
      %v1031 = vshrl.u32 %v1030, 7
      %v1032 = vsub.s32 %v693, %v1031
      %v1033 = vrot.slane %v920, %v1032
      %v1034 = vlaneseq
      %v1035 = vshrl.u32 %v1034, 7
      %v1036 = vsub.s32 %v693, %v1035
      %v1037 = vrot.slane %v922, %v1036
      %v1038 = vlaneseq
      %v1039 = vshrl.u32 %v1038, 7
      %v1040 = vsub.s32 %v693, %v1039
      %v1041 = vrot.slane %v924, %v1040
      %v1042 = vlaneseq
      %v1043 = vshrl.u32 %v1042, 7
      %v1044 = vsub.s32 %v693, %v1043
      %v1045 = vrot.slane %v926, %v1044
      %v1046 = vlaneseq
      %v1047 = vshrl.u32 %v1046, 7
      %v1048 = vsub.s32 %v693, %v1047
      %v1049 = vrot.slane %v928, %v1048
      %v1050 = vlaneseq
      %v1051 = vshrl.u32 %v1050, 7
      %v1052 = vsub.s32 %v693, %v1051
      %v1053 = vrot.slane %v930, %v1052
      %v1054 = vlaneseq
      %v1055 = vshrl.u32 %v1054, 7
      %v1056 = vsub.s32 %v693, %v1055
      %v1057 = vrot.slane %v932, %v1056
      %v1058 = vsel %vm794, %v965, %v961
      %v1059 = vsel %vm796, %v969, %v1058
      %v1060 = vsel %vm798, %v973, %v1059
      %v1061 = vsel %vm800, %v977, %v1060
      %v1062 = vsel %vm802, %v981, %v1061
      %v1063 = vsel %vm804, %v985, %v1062
      %v1064 = vsel %vm806, %v989, %v1063
      %v1065 = vsel %vm794, %v997, %v993
      %v1066 = vsel %vm796, %v1001, %v1065
      %v1067 = vsel %vm798, %v1005, %v1066
      %v1068 = vsel %vm800, %v1009, %v1067
      %v1069 = vsel %vm802, %v1013, %v1068
      %v1070 = vsel %vm804, %v1017, %v1069
      %v1071 = vsel %vm806, %v1021, %v1070
      %v1072 = vsel %vm794, %v1029, %v1025
      %v1073 = vsel %vm796, %v1033, %v1072
      %v1074 = vsel %vm798, %v1037, %v1073
      %v1075 = vsel %vm800, %v1041, %v1074
      %v1076 = vsel %vm802, %v1045, %v1075
      %v1077 = vsel %vm804, %v1049, %v1076
      %v1078 = vsel %vm806, %v1053, %v1077
      %1083 = vxpose.xlu0.b32.start [1/16] %v1064, 128
      %1084 = vxpose.xlu0.b32.cont [2/16] %v1071, 128
      %1085 = vxpose.xlu0.b32.cont [3/16] %v1078, 128
      %1086 = vxpose.xlu0.b32.cont [4/16] %v1057, 128
      %1087 = vxpose.xlu0.b32.cont [5/16] 0.0, 128
      %1088 = vxpose.xlu0.b32.cont [6/16] 0.0, 128
      %1089 = vxpose.xlu0.b32.cont [7/16] 0.0, 128
      %1090 = vxpose.xlu0.b32.cont [8/16] 0.0, 128
      %1091 = vxpose.xlu0.b32.cont [9/16] 0.0, 128
      %1092 = vxpose.xlu0.b32.cont [10/16] 0.0, 128
      %1093 = vxpose.xlu0.b32.cont [11/16] 0.0, 128
      %1094 = vxpose.xlu0.b32.cont [12/16] 0.0, 128
      %1095 = vxpose.xlu0.b32.cont [13/16] 0.0, 128
      %1096 = vxpose.xlu0.b32.cont [14/16] 0.0, 128
      %1097 = vxpose.xlu0.b32.cont [15/16] 0.0, 128
      %1098 = vxpose.xlu0.b32.end [16/16] 0.0, 128
      %v1099 = vpop.trf.xlu0
      %v1100 = vpop.trf.xlu0
      %v1101 = vpop.trf.xlu0
      %v1102 = vpop.trf.xlu0
      %v1103 = vpop.trf.xlu0
      %v1104 = vpop.trf.xlu0
      %v1105 = vpop.trf.xlu0
      %v1106 = vpop.trf.xlu0
      %v1107 = vpop.trf.xlu0
      %v1108 = vpop.trf.xlu0
      %v1109 = vpop.trf.xlu0
      %v1110 = vpop.trf.xlu0
      %v1111 = vpop.trf.xlu0
      %v1112 = vpop.trf.xlu0
      %v1113 = vpop.trf.xlu0
      %v1114 = vpop.trf.xlu0
      %v1115 = vlaneseq
      %v1116 = vshrl.u32 %v1115, 7
      %v1117 = vadd.s32 %v1116, 8
      %v1118 = vadd.s32 %v1116, 16
      %v1119 = vadd.s32 %v1116, 24
      %vm1120 = vcmp.le.s32.totalorder %v1116, %v693
      %vm1121 = vcmp.le.s32.totalorder %v1117, %v693
      %vm1122 = vcmp.le.s32.totalorder %v1118, %v693
      %vm1123 = vcmp.le.s32.totalorder %v1119, %v693
      %v1124 = vsel %vm1120, 1, 0
      %v1125 = vsel %vm1121, 1, 0
      %v1126 = vsel %vm1122, 1, 0
      %v1127 = vsel %vm1123, 1, 0
      %v1128 = vcvt.s32.f32 %v1124
      %v1129 = vcvt.s32.f32 %v1125
      %v1130 = vcvt.s32.f32 %v1126
      %v1131 = vcvt.s32.f32 %v1127
      %vm1132 = vcmask 203776
      %v1134 = vsel %vm1132, %v1099, 0
      %vm1136 = vcmask 1040384
      %v1138 = vsel %vm1136, %v1131, 0
      %1140 = vmatprep.subr.mxu0 0.0
      %1141 = vmatpush1.msra.mxu0 %v1128
      %1142 = vmatprep.subr.mxu0 0.0
      %1143 = vmatpush1.msra.mxu0 %v1129
      %1144 = vmatprep.subr.mxu0 0.0
      %1145 = vmatpush1.msra.mxu0 %v1130
      %1146 = vmatprep.subr.mxu0 0.0
      %1147 = vmatpush1.msra.mxu0 %v1138
      %1148 = vmatprep.subr.mxu0 0.0
      %1149 = vmatpush1.msra.mxu0 0.0
      %1150 = vmatprep.subr.mxu0 0.0
      %1151 = vmatpush1.msra.mxu0 0.0
      %1152 = vmatprep.subr.mxu0 0.0
      %1153 = vmatpush1.msra.mxu0 0.0
      %1154 = vmatprep.subr.mxu0 0.0
      %1155 = vmatpush1.msra.mxu0 0.0
      %1156 = vmatprep.subr.mxu0 0.0
      %1157 = vmatpush1.msra.mxu0 0.0
      %1158 = vmatprep.subr.mxu0 0.0
      %1159 = vmatpush1.msra.mxu0 0.0
      %1160 = vmatprep.subr.mxu0 0.0
      %1161 = vmatpush1.msra.mxu0 0.0
      %1162 = vmatprep.subr.mxu0 0.0
      %1163 = vmatpush1.msra.mxu0 0.0
      %1164 = vmatprep.subr.mxu0 0.0
      %1165 = vmatpush1.msra.mxu0 0.0
      %1166 = vmatprep.subr.mxu0 0.0
      %1167 = vmatpush1.msra.mxu0 0.0
      %1168 = vmatprep.subr.mxu0 0.0
      %1169 = vmatpush1.msra.mxu0 0.0
      %1170 = vmatprep.subr.mxu0 0.0
      %1171 = vmatpush1.msra.mxu0 0.0
      %1172 = vmatprep.subr.mxu0 0.0
      %1173 = vmatpush1.msra.mxu0 0.0
      %1174 = vmatprep.subr.mxu0 0.0
      %1175 = vmatpush1.msra.mxu0 0.0
      %1176 = vmatprep.subr.mxu0 0.0
      %1177 = vmatpush1.msra.mxu0 0.0
      %1178 = vmatprep.subr.mxu0 0.0
      %1179 = vmatpush1.msra.mxu0 0.0
      %1180 = vmatprep.subr.mxu0 0.0
      %1181 = vmatpush1.msra.mxu0 0.0
      %1182 = vmatprep.subr.mxu0 0.0
      %1183 = vmatpush1.msra.mxu0 0.0
      %1184 = vmatprep.subr.mxu0 0.0
      %1185 = vmatpush1.msra.mxu0 0.0
      %1186 = vmatprep.subr.mxu0 0.0
      %1187 = vmatpush1.msra.mxu0 0.0
      %1188 = vmatprep.subr.mxu0 0.0
      %1189 = vmatpush1.msra.mxu0 0.0
      %1190 = vmatprep.subr.mxu0 0.0
      %1191 = vmatpush1.msra.mxu0 0.0
      %1192 = vmatprep.subr.mxu0 0.0
      %1193 = vmatpush1.msra.mxu0 0.0
      %1194 = vmatprep.subr.mxu0 0.0
      %1195 = vmatpush1.msra.mxu0 0.0
      %1196 = vmatprep.subr.mxu0 0.0
      %1197 = vmatpush1.msra.mxu0 0.0
      %1198 = vmatprep.subr.mxu0 0.0
      %1199 = vmatpush1.msra.mxu0 0.0
      %1200 = vmatprep.subr.mxu0 0.0
      %1201 = vmatpush1.msra.mxu0 0.0
      %1202 = vmatprep.subr.mxu0 0.0
      %1203 = vmatpush1.msra.mxu0 0.0
      %1204 = vmatprep.mubr.f32.mxu0 0.0
      %1205 = vmatmul.mubr.f32.gmra.mrb[0].mxu0 %v1134
      %v1206 = vpop.f32.mrb[0].mxu0
      %v1207 = vadd.f32 0.0, %v1206
      %v1208 = vpop.f32.mrb[0].mxu0
      %1209 = vdwg.mxu0
      %v1211 = vsel %vm1132, %v842, 0
      %1213 = vmatprep.subr.mxu0 0.0
      %1214 = vmatpush1.msra.mxu0 %v1128
      %1215 = vmatprep.subr.mxu0 0.0
      %1216 = vmatpush1.msra.mxu0 %v1129
      %1217 = vmatprep.subr.mxu0 0.0
      %1218 = vmatpush1.msra.mxu0 %v1130
      %1219 = vmatprep.subr.mxu0 0.0
      %1220 = vmatpush1.msra.mxu0 %v1138
      %1221 = vmatprep.subr.mxu0 0.0
      %1222 = vmatpush1.msra.mxu0 0.0
      %1223 = vmatprep.subr.mxu0 0.0
      %1224 = vmatpush1.msra.mxu0 0.0
      %1225 = vmatprep.subr.mxu0 0.0
      %1226 = vmatpush1.msra.mxu0 0.0
      %1227 = vmatprep.subr.mxu0 0.0
      %1228 = vmatpush1.msra.mxu0 0.0
      %1229 = vmatprep.subr.mxu0 0.0
      %1230 = vmatpush1.msra.mxu0 0.0
      %1231 = vmatprep.subr.mxu0 0.0
      %1232 = vmatpush1.msra.mxu0 0.0
      %1233 = vmatprep.subr.mxu0 0.0
      %1234 = vmatpush1.msra.mxu0 0.0
      %1235 = vmatprep.subr.mxu0 0.0
      %1236 = vmatpush1.msra.mxu0 0.0
      %1237 = vmatprep.subr.mxu0 0.0
      %1238 = vmatpush1.msra.mxu0 0.0
      %1239 = vmatprep.subr.mxu0 0.0
      %1240 = vmatpush1.msra.mxu0 0.0
      %1241 = vmatprep.subr.mxu0 0.0
      %1242 = vmatpush1.msra.mxu0 0.0
      %1243 = vmatprep.subr.mxu0 0.0
      %1244 = vmatpush1.msra.mxu0 0.0
      %1245 = vmatprep.subr.mxu0 0.0
      %1246 = vmatpush1.msra.mxu0 0.0
      %1247 = vmatprep.subr.mxu0 0.0
      %1248 = vmatpush1.msra.mxu0 0.0
      %1249 = vmatprep.subr.mxu0 0.0
      %1250 = vmatpush1.msra.mxu0 0.0
      %1251 = vmatprep.subr.mxu0 0.0
      %1252 = vmatpush1.msra.mxu0 0.0
      %1253 = vmatprep.subr.mxu0 0.0
      %1254 = vmatpush1.msra.mxu0 0.0
      %1255 = vmatprep.subr.mxu0 0.0
      %1256 = vmatpush1.msra.mxu0 0.0
      %1257 = vmatprep.subr.mxu0 0.0
      %1258 = vmatpush1.msra.mxu0 0.0
      %1259 = vmatprep.subr.mxu0 0.0
      %1260 = vmatpush1.msra.mxu0 0.0
      %1261 = vmatprep.subr.mxu0 0.0
      %1262 = vmatpush1.msra.mxu0 0.0
      %1263 = vmatprep.subr.mxu0 0.0
      %1264 = vmatpush1.msra.mxu0 0.0
      %1265 = vmatprep.subr.mxu0 0.0
      %1266 = vmatpush1.msra.mxu0 0.0
      %1267 = vmatprep.subr.mxu0 0.0
      %1268 = vmatpush1.msra.mxu0 0.0
      %1269 = vmatprep.subr.mxu0 0.0
      %1270 = vmatpush1.msra.mxu0 0.0
      %1271 = vmatprep.subr.mxu0 0.0
      %1272 = vmatpush1.msra.mxu0 0.0
      %1273 = vmatprep.subr.mxu0 0.0
      %1274 = vmatpush1.msra.mxu0 0.0
      %1275 = vmatprep.subr.mxu0 0.0
      %1276 = vmatpush1.msra.mxu0 0.0
      %1277 = vmatprep.mubr.f32.mxu0 0.0
      %1278 = vmatmul.mubr.f32.gmra.mrb[0].mxu0 %v1211
      %v1279 = vpop.f32.mrb[0].mxu0
      %v1280 = vadd.f32 1e-16, %v1279
      %v1281 = vpop.f32.mrb[0].mxu0
      %1282 = vdwg.mxu0
      %v1283 = vrcp.pop %v1280
      %v1284 = vmul.f32 %v1207, %v1283
      %v1285 = vsel %vm1132, %v1099, 0.0
      %1286 = vadd.xlane.f32.xlu0 %v1285
      %v1287 = vpop.xlane.xlu0 %1286
      %v1288 = vadd.f32 %v1287, 1e-16
      %v1289 = vrcp.pop %v1288
      %v1290 = vmul.f32 %v1099, %v1289
      %v1291 = vmul.f32 %v1284, %v1290
      %v1292 = vsel %vm1132, %v1291, 0.0
      %1293 = vadd.xlane.f32.xlu0 %v1292
      %v1294 = vpop.xlane.xlu0 %1293
      %vm1295 = vcmask 7168
      %1296 = vst.msk [vmem:[%s2] sm:$0xff] %vm1295, %v1294
    $region25: #{tpu_custom_call.1} parent=1 // pred_fallthru
      _
    // Predicated region
    $region26: #{tpu_custom_call.1} parent=1 // pred_check
      _
    $region27: #{tpu_custom_call.1} parent=1 // pred_check_branch
      %1298 = sbr.rel (0) target = $region29
    $region28: #{tpu_custom_call.1} parent=1 // pred_region
      _
    $region29: #{tpu_custom_call.1} parent=1 // pred_fallthru
      _
    // Predicated region
    $region30: #{tpu_custom_call.1} parent=1 // pred_check
      _
    $region31: #{tpu_custom_call.1} parent=1 // pred_check_branch
      %1300 = sbr.rel (0) target = $region33
    $region32: #{tpu_custom_call.1} parent=1 // pred_region
      _
    $region33: #{tpu_custom_call.1} parent=1 // pred_fallthru
      _
    %1301 = vsyncpa [#allocation5], 1
    %1302 = vsyncpa [#allocation7], 1

</llo_original>
